<compile_context>
chip_gen: v6e
topology: v6e:2x2x1
jax: 0.10.0
libtpu: 0.0.40
codegen_flags: <defaults>
</compile_context>

<pallas_src>
import jax
import jax.numpy as jnp
from jax import lax
from jax.experimental import pallas as pl
from jax.experimental.pallas import tpu as pltpu

WIDTH = 32
DEPTH = 4
NODE_DIM = 3
EDGE_DIM = 3 + 4          # 7
KER_HID = WIDTH // 4      # 8


def _round_up(x, m):
    return (x + m - 1) // m * m


# --------------------------------------------------------------------------- kernel


def _make_kernel(mm_dtype):
    """Kernel factory. mm_dtype = operand dtype of the two big one-hot MXU contractions."""
    use_bf16 = jnp.dtype(mm_dtype) == jnp.dtype(jnp.bfloat16)
    f32 = jnp.float32

    def kernel(
        # edge-tiled inputs (all lane-dense along the edge axis)
        src_ref,        # [1, tE]  int32  source node id per edge (padded edges = n_p)
        dst_ref,        # [1, tE]  int32  destination node id per edge (padded edges = n_p)
        eaT_ref,        # [7, tE]  f32    edge attributes (transposed)
        # node-resident inputs (transposed [feature, node]; node axis on lanes)
        invdeg_ref,     # [1, N]   f32    1 / max(in_degree, 1)
        x0T_ref,        # [3, N]   f32    raw node features (transposed)
        # parameters (whole-array VMEM resident; pre-transposed so all matmuls are NN/NT)
        w1T_ref, b1T_ref,        # fc1:     [32, 3], [32, 1]
        wk1T_ref, bk1T_ref,      # kernel0: [8, 7],  [8, 1]
        wk2T_ref, bk2T_ref,      # kernel2: [32, 8], [32, 1]
        rootT_ref, cbiasT_ref,   # NNConv:  [32, 32], [32, 1]
        # output
        hidT_ref,       # [32, N] f32     final hidden state (fc2 applied outside)
        # scratch
        x_vmem,         # [32, N] f32     node state, persists across the whole grid
        agg_vmem,       # [32, N] f32     per-depth scatter-mean accumulator
        *opt_scratch,   # ([32, N] bf16 node-state copy; only on the bf16 MXU path)
    ):
        d = pl.program_id(0)            # depth step (carries node state  -> arbitrary)
        t = pl.program_id(1)            # edge tile  (carries accumulator -> arbitrary)
        n_d = pl.num_programs(0)
        n_t = pl.num_programs(1)
        n_nodes = x_vmem.shape[1]
        te = eaT_ref.shape[1]

        # ---- one-time init: x = fc1(x0)  (no activation on fc1, as in the module) ----
        @pl.when((d == 0) & (t == 0))
        def _init_x():
            x_vmem[...] = (
                jnp.dot(w1T_ref[...], x0T_ref[...], preferred_element_type=f32)
                + b1T_ref[...]
            )

        # ---- per-depth init: zero the aggregation accumulator ----
        @pl.when(t == 0)
        def _init_agg():
            agg_vmem[...] = jnp.zeros_like(agg_vmem)

        if use_bf16:
            x_mm_vmem = opt_scratch[0]

            # rec #3: cast the node state to bf16 once per depth step, not once per tile.
            @pl.when(t == 0)
            def _refresh_x_mm():
                x_mm_vmem[...] = x_vmem[...].astype(mm_dtype)

            x_mm = x_mm_vmem[...]
        else:
            x_mm = x_vmem[...]          # f32 path: MXU takes the node state as-is.

        # ---- edge kernel MLP on this tile (depth-invariant weights; cheap recompute) ----
        h = jnp.maximum(
            jnp.dot(wk1T_ref[...], eaT_ref[...], preferred_element_type=f32)
            + bk1T_ref[...], 0.0)                                               # [8,  tE]
        w_edgeT = (jnp.dot(wk2T_ref[...], h, preferred_element_type=f32)
                   + bk2T_ref[...])                                             # [32, tE]

        # ---- ONE shared iota; both one-hots in the lane-dense [N, tE] orientation ----
        # Padded edges carry node id n_nodes which matches no iota row -> zero column.
        node_iota = lax.broadcasted_iota(jnp.int32, (n_nodes, te), 0)           # [N, tE]
        gath_oh = (node_iota == src_ref[...]).astype(f32)                       # [N, tE]
        scat_oh = (node_iota == dst_ref[...]).astype(f32)                       # [N, tE]
        if use_bf16:
            gath_oh = gath_oh.astype(mm_dtype)   # 0/1 exact in bf16
            scat_oh = scat_oh.astype(mm_dtype)

        # ---- gather x[src]: plain NN contraction over the node axis (MXU) ----
        x_srcT = jnp.dot(x_mm, gath_oh, preferred_element_type=f32)             # [32, tE]

        # ---- diagonal NNConv message (f32 elementwise, VPU) ----
        msgT = x_srcT * w_edgeT                                                 # [32, tE]

        # ---- scatter-add by dst: NT contraction over the edge axis (MXU) ----
        agg_vmem[...] += lax.dot_general(
            msgT.astype(mm_dtype), scat_oh,
            dimension_numbers=(((1,), (1,)), ((), ())),
            preferred_element_type=f32)                                         # [32, N]

        # ---- node update once per depth step, after the last edge tile ----
        @pl.when(t == n_t - 1)
        def _node_update():
            x_new = (agg_vmem[...] * invdeg_ref[...]                            # scatter-mean
                     + jnp.dot(rootT_ref[...], x_vmem[...], preferred_element_type=f32)
                     + cbiasT_ref[...])
            x_vmem[...] = jnp.maximum(x_new, 0.0)

        # ---- emit the hidden state once, at the very end of the grid ----
        @pl.when((d == n_d - 1) & (t == n_t - 1))
        def _emit():
            hidT_ref[...] = x_vmem[...]

    return kernel


# --------------------------------------------------------------------------- sizing helpers


def _device_kind():
    try:
        return jax.devices()[0].device_kind.lower()
    except Exception:
        return ""


def _vmem_budget_bytes():
    # recs #5/#6/#7: ~48 MiB usable on v7x (64 MiB physical), ~100 MiB on v5e/v6e (128 MiB).
    try:
        cap = int(pltpu.get_tpu_info().vmem_capacity_bytes)
    except Exception:
        cap = 64 << 20
    return max(32 << 20, min(cap - (16 << 20), int(cap * 0.8)))


def _auto_matmul_dtype(kind):
    # v6e/v7x: MXU has 3-4x slack vs the VALU-bound one-hot build, so f32 contractions
    # trade idle MXU cycles for removing every bf16 cast pass (and all bf16 rounding).
    # v5e / older / unknown: keep the cheap bf16 MXU path.
    if ("v6" in kind) or ("v7" in kind) or ("7x" in kind):
        return jnp.float32
    return jnp.bfloat16


def _param_bytes():
    return 4 * (NODE_DIM * WIDTH + WIDTH + EDGE_DIM * KER_HID + KER_HID
                + KER_HID * WIDTH + WIDTH + WIDTH * WIDTH + WIDTH)


def _estimate_vmem_bytes(edge_tile, n_p, mm_dtype):
    mm_extra = 2 if jnp.dtype(mm_dtype) == jnp.dtype(jnp.bfloat16) else 0
    onehot_tmp = edge_tile * n_p * (4 + 2 * 4 + 2 * mm_extra)     # iota + 2 one-hots (+ bf16 copies)
    edge_blocks = 2 * edge_tile * (4 + 4 + 4 * EDGE_DIM)          # double-buffered src/dst/edge_attr
    edge_tmp = 6 * 4 * edge_tile * WIDTH                          # h / w_edge / x_src / msg temporaries
    node_resident = 4 * n_p * (NODE_DIM + 1 + WIDTH)              # x0, inv_deg, hidden output
    scratch = (8 + mm_extra) * n_p * WIDTH                        # x, agg (+ bf16 x copy)
    return (onehot_tmp + edge_blocks + edge_tmp + node_resident + scratch
            + _param_bytes() + (8 << 20))                         # + headroom


def _auto_edge_tile(n_p, n_edges, mm_dtype, budget, kind):
    if ("v7" in kind) or ("7x" in kind):
        cap = 512                 # 64 MiB VMEM: keep the O(edge_tile*n_p) temporaries small
    elif ("v6" in kind) or ("v5" in kind):
        cap = 2048                # 128 MiB VMEM: big tiles amortize per-grid-step overhead
    else:
        cap = 1024
    cap = min(cap, _round_up(max(n_edges, 1), 128))               # never pad past one tile
    tile = 128
    for cand in (256, 512, 1024, 2048):
        if cand <= cap and _estimate_vmem_bytes(cand, n_p, mm_dtype) <= budget:
            tile = cand
    return tile


# --------------------------------------------------------------------------- wrapper


def net_mp_gauss_forward(x, edge_index, edge_attr, params, *,
                         edge_tile=None, matmul_dtype=None):
    """x: [N, 3] f32, edge_index: [2, E] int32, edge_attr: [E, 7] f32 -> [N, 1] f32."""
    (w1, b1, wk1, bk1, wk2, bk2, root, cbias, w2, b2) = params

    N = x.shape[0]
    E = edge_attr.shape[0]
    src = edge_index[0].astype(jnp.int32)
    dst = edge_index[1].astype(jnp.int32)

    kind = _device_kind()
    budget = _vmem_budget_bytes()
    if matmul_dtype is None:
        matmul_dtype = _auto_matmul_dtype(kind)
    use_bf16 = jnp.dtype(matmul_dtype) == jnp.dtype(jnp.bfloat16)

    n_p = _round_up(N, 8)
    if edge_tile is None:
        edge_tile = _auto_edge_tile(n_p, E, matmul_dtype, budget, kind)
    assert edge_tile % 128 == 0, "edge_tile must be a multiple of 128 (lane width)"
    e_p = _round_up(max(E, 1), edge_tile)
    n_tiles = e_p // edge_tile

    # ---- transposed ([feature, node/edge]) operands: lane-dense node/edge axes ----
    x0T = jnp.pad(x, ((0, n_p - N), (0, 0))).T                    # [3, n_p]
    eaT = jnp.pad(edge_attr, ((0, e_p - E), (0, 0))).T            # [7, e_p]
    # Padded edges point at node id n_p, which matches no iota row -> zero one-hot column.
    src_p = jnp.pad(src, (0, e_p - E), constant_values=n_p).reshape(1, e_p)
    dst_p = jnp.pad(dst, (0, e_p - E), constant_values=n_p).reshape(1, e_p)

    # Mean-aggregation normalization, exact f32, computed once outside the kernel.
    deg = jnp.zeros((n_p,), jnp.float32).at[dst].add(1.0)
    inv_deg = (1.0 / jnp.maximum(deg, 1.0)).reshape(1, n_p)

    w1T, b1T = w1.T, b1.T                                         # [32, 3], [32, 1]
    wk1T, bk1T = wk1.T, bk1.T                                     # [8, 7],  [8, 1]
    wk2T, bk2T = wk2.T, bk2.T                                     # [32, 8], [32, 1]
    rootT, cbiasT = root.T, cbias.T                               # [32, 32], [32, 1]

    def edge_lanes(d, t):      # [*, e_p] arrays tiled along lanes
        return (0, t)

    def whole(d, t):           # whole-array resident blocks (constant index -> no re-DMA)
        return (0, 0)

    in_specs = [
        pl.BlockSpec((1, edge_tile), edge_lanes),            # src  (lane-dense)
        pl.BlockSpec((1, edge_tile), edge_lanes),            # dst  (lane-dense)
        pl.BlockSpec((EDGE_DIM, edge_tile), edge_lanes),     # edge_attr^T
        pl.BlockSpec((1, n_p), whole),                       # inv_deg
        pl.BlockSpec((NODE_DIM, n_p), whole),                # x0^T
        pl.BlockSpec((WIDTH, NODE_DIM), whole),              # w1^T
        pl.BlockSpec((WIDTH, 1), whole),                     # b1^T
        pl.BlockSpec((KER_HID, EDGE_DIM), whole),            # wk1^T
        pl.BlockSpec((KER_HID, 1), whole),                   # bk1^T
        pl.BlockSpec((WIDTH, KER_HID), whole),               # wk2^T
        pl.BlockSpec((WIDTH, 1), whole),                     # bk2^T
        pl.BlockSpec((WIDTH, WIDTH), whole),                 # root^T
        pl.BlockSpec((WIDTH, 1), whole),                     # cbias^T
    ]
    out_spec = pl.BlockSpec((WIDTH, n_p), whole)

    scratch_shapes = [
        pltpu.VMEM((WIDTH, n_p), jnp.float32),               # node state x^T
        pltpu.VMEM((WIDTH, n_p), jnp.float32),               # scatter-mean accumulator
    ]
    if use_bf16:
        scratch_shapes.append(pltpu.VMEM((WIDTH, n_p), jnp.bfloat16))  # per-depth bf16 x copy

    est_vmem = _estimate_vmem_bytes(edge_tile, n_p, matmul_dtype)
    vmem_limit = int(max(32 << 20, min(max(est_vmem, 32 << 20), budget)))

    flops = (
        2 * n_p * NODE_DIM * WIDTH
        + DEPTH * n_tiles * (
            2 * edge_tile * (EDGE_DIM * KER_HID + KER_HID * WIDTH)   # edge MLP
            + 4 * edge_tile * n_p * WIDTH                            # gather + scatter contractions
            + edge_tile * WIDTH)                                     # message elementwise
        + DEPTH * (2 * n_p * WIDTH * WIDTH + 3 * n_p * WIDTH))       # root matmul + update
    bytes_accessed = (
        4 * DEPTH * e_p * (EDGE_DIM + 2)                             # edge tiles re-streamed per depth
        + 4 * n_p * (NODE_DIM + 1 + WIDTH)                           # x0, inv_deg, hidden out
        + _param_bytes())

    hidden_T = pl.pallas_call(
        _make_kernel(matmul_dtype),
        out_shape=jax.ShapeDtypeStruct((WIDTH, n_p), jnp.float32),
        grid=(DEPTH, n_tiles),
        in_specs=in_specs,
        out_specs=out_spec,
        scratch_shapes=scratch_shapes,
        compiler_params=pltpu.CompilerParams(
            # Both axes carry state (node state / accumulator), so neither may be 'parallel'.
            # TODO(synk): rec #8 -- on v7x the second TensorCore is idle; a core_map split of
            # edge tiles with a cross-core agg reduction (or a leading batch-of-graphs
            # 'parallel' axis) would recover ~2x there.
            dimension_semantics=("arbitrary", "arbitrary"),
            vmem_limit_bytes=vmem_limit,
        ),
        cost_estimate=pl.CostEstimate(
            flops=int(flops), transcendentals=0, bytes_accessed=int(bytes_accessed)),
    )(src_p, dst_p, eaT, inv_deg, x0T,
      w1T, b1T, wk1T, bk1T, wk2T, bk2T, rootT, cbiasT)

    # fc2 outside the kernel: avoids a 1-wide masked store / 1-column MXU matmul.
    return hidden_T[:, :N].T @ w2 + b2


# --------------------------------------------------------------------------- reference / params


def reference_forward(x, edge_index, edge_attr, params):
    """Pure-JAX reference of the module (diagonal NNConv, aggr='mean')."""
    (w1, b1, wk1, bk1, wk2, bk2, root, cbias, w2, b2) = params
    src, dst = edge_index[0], edge_index[1]
    N = x.shape[0]
    h = x @ w1 + b1
    w_edge = jnp.maximum(edge_attr @ wk1 + bk1, 0.0) @ wk2 + bk2
    deg = jnp.maximum(jnp.zeros((N,), jnp.float32).at[dst].add(1.0), 1.0)
    for _ in range(DEPTH):
        msg = h[src] * w_edge
        agg = jnp.zeros((N, WIDTH), jnp.float32).at[dst].add(msg) / deg[:, None]
        h = jnp.maximum(agg + h @ root + cbias, 0.0)
    return h @ w2 + b2


def init_params(key):
    """Deterministic synthetic parameter init (PyTorch-Linear-like uniform)."""
    def linear(k, fan_in, fan_out):
        k1, k2 = jax.random.split(k)
        bound = 1.0 / jnp.sqrt(fan_in)
        w = jax.random.uniform(k1, (fan_in, fan_out), jnp.float32, -bound, bound)
        b = jax.random.uniform(k2, (1, fan_out), jnp.float32, -bound, bound)
        return w, b

    keys = jax.random.split(key, 6)
    w1, b1 = linear(keys[0], NODE_DIM, WIDTH)          # fc1
    wk1, bk1 = linear(keys[1], EDGE_DIM, KER_HID)      # kernel Linear(7, 8)
    wk2, bk2 = linear(keys[2], KER_HID, WIDTH)         # kernel Linear(8, 32)
    bound = 1.0 / jnp.sqrt(WIDTH)
    root = jax.random.uniform(keys[3], (WIDTH, WIDTH), jnp.float32, -bound, bound)
    cbias = jax.random.uniform(keys[4], (1, WIDTH), jnp.float32, -bound, bound)
    w2, b2 = linear(keys[5], WIDTH, 1)                 # fc2
    return (w1, b1, wk1, bk1, wk2, bk2, root, cbias, w2, b2)


# --------------------------------------------------------------------------- test


if __name__ == "__main__":
    key = jax.random.PRNGKey(0)
    k_x, k_src, k_dst, k_ea, k_par = jax.random.split(key, 5)

    N, E = 64, 256
    x = jax.random.normal(k_x, (N, NODE_DIM), jnp.float32)
    src = jax.random.randint(k_src, (E,), 0, N, dtype=jnp.int32)
    dst = jax.random.randint(k_dst, (E,), 0, N, dtype=jnp.int32)
    edge_index = jnp.stack([src, dst], axis=0)                  # [2, E]
    edge_attr = jax.random.normal(k_ea, (E, EDGE_DIM), jnp.float32)
    params = init_params(k_par)

    ref = reference_forward(x, edge_index, edge_attr, params)

    # (1) multi-tile accumulator path + bf16 MXU path (v5e-style configuration)
    out_bf16 = net_mp_gauss_forward(x, edge_index, edge_attr, params,
                                    edge_tile=128, matmul_dtype=jnp.bfloat16)
    out_bf16 = jax.block_until_ready(out_bf16)
    assert out_bf16.shape == (N, 1) and out_bf16.dtype == jnp.float32
    err = float(jnp.max(jnp.abs(out_bf16 - ref)))
    if not err < 5e-2:
        raise AssertionError(f"bf16-path mismatch: max_abs_err={err}")

    # (2) multi-tile + f32 MXU path (v6e/v7x-style configuration)
    out_f32 = net_mp_gauss_forward(x, edge_index, edge_attr, params,
                                   edge_tile=128, matmul_dtype=jnp.float32)
    out_f32 = jax.block_until_ready(out_f32)
    err = float(jnp.max(jnp.abs(out_f32 - ref)))
    if not err < 5e-2:          # typically ~1e-5; loose bound covers default matmul precision
        raise AssertionError(f"f32-path mismatch: max_abs_err={err}")

    # (3) fully automatic configuration for the local TPU generation
    out_auto = net_mp_gauss_forward(x, edge_index, edge_attr, params)
    out_auto = jax.block_until_ready(out_auto)
    err = float(jnp.max(jnp.abs(out_auto - ref)))
    if not err < 5e-2:
        raise AssertionError(f"auto-path mismatch: max_abs_err={err}")

    print("KERNEL_OK")
</pallas_src>

<mosaic_0001>
module attributes {stable_mosaic.version = 11 : i64} {
  func.func @kernel(%arg0: i32, %arg1: i32, %arg2: memref<1x128xi32, #tpu.memory_space<vmem>>, %arg3: memref<1x128xi32, #tpu.memory_space<vmem>>, %arg4: memref<7x128xf32, #tpu.memory_space<vmem>>, %arg5: memref<1x64xf32, #tpu.memory_space<vmem>>, %arg6: memref<3x64xf32, #tpu.memory_space<vmem>>, %arg7: memref<32x3xf32, #tpu.memory_space<vmem>>, %arg8: memref<32x1xf32, #tpu.memory_space<vmem>>, %arg9: memref<8x7xf32, #tpu.memory_space<vmem>>, %arg10: memref<8x1xf32, #tpu.memory_space<vmem>>, %arg11: memref<32x8xf32, #tpu.memory_space<vmem>>, %arg12: memref<32x1xf32, #tpu.memory_space<vmem>>, %arg13: memref<32x32xf32, #tpu.memory_space<vmem>>, %arg14: memref<32x1xf32, #tpu.memory_space<vmem>>, %arg15: memref<32x64xf32, #tpu.memory_space<vmem>>, %arg16: memref<32x64xf32, #tpu.memory_space<vmem>>, %arg17: memref<32x64xf32, #tpu.memory_space<vmem>>, %arg18: memref<32x64xbf16, #tpu.memory_space<vmem>>) attributes {dimension_semantics = [#tpu.dimension_semantics<arbitrary>, #tpu.dimension_semantics<arbitrary>], iteration_bounds = array<i64: 4, 2>, scalar_prefetch = 0 : i64, scratch_operands = 3 : i64, tpu.core_type = #tpu.core_type<tc>, window_params = [{transform_indices = @transform_0, window_bounds = array<i64: 1, 128>}, {transform_indices = @transform_1, window_bounds = array<i64: 1, 128>}, {transform_indices = @transform_2, window_bounds = array<i64: 7, 128>}, {pipeline_mode = #tpu.pipeline_mode<synchronous>, transform_indices = @transform_3, window_bounds = array<i64: 1, 64>}, {pipeline_mode = #tpu.pipeline_mode<synchronous>, transform_indices = @transform_4, window_bounds = array<i64: 3, 64>}, {pipeline_mode = #tpu.pipeline_mode<synchronous>, transform_indices = @transform_5, window_bounds = array<i64: 32, 3>}, {pipeline_mode = #tpu.pipeline_mode<synchronous>, transform_indices = @transform_6, window_bounds = array<i64: 32, 1>}, {pipeline_mode = #tpu.pipeline_mode<synchronous>, transform_indices = @transform_7, window_bounds = array<i64: 8, 7>}, {pipeline_mode = #tpu.pipeline_mode<synchronous>, transform_indices = @transform_8, window_bounds = array<i64: 8, 1>}, {pipeline_mode = #tpu.pipeline_mode<synchronous>, transform_indices = @transform_9, window_bounds = array<i64: 32, 8>}, {pipeline_mode = #tpu.pipeline_mode<synchronous>, transform_indices = @transform_10, window_bounds = array<i64: 32, 1>}, {pipeline_mode = #tpu.pipeline_mode<synchronous>, transform_indices = @transform_11, window_bounds = array<i64: 32, 32>}, {pipeline_mode = #tpu.pipeline_mode<synchronous>, transform_indices = @transform_12, window_bounds = array<i64: 32, 1>}, {pipeline_mode = #tpu.pipeline_mode<synchronous>, transform_indices = @transform_13, window_bounds = array<i64: 32, 64>}]} {
    %c0_i32 = arith.constant 0 : i32
    %0 = arith.cmpi eq, %arg0, %c0_i32 : i32
    %c0_i32_0 = arith.constant 0 : i32
    %1 = arith.cmpi eq, %arg1, %c0_i32_0 : i32
    %2 = arith.andi %0, %1 : i1
    %3 = arith.extui %2 : i1 to i32
    %c0_i32_1 = arith.constant 0 : i32
    %4 = arith.cmpi ne, %3, %c0_i32_1 : i32
    scf.if %4 {
      %c0_32 = arith.constant 0 : index
      %c0_33 = arith.constant 0 : index
      %53 = vector.load %arg7[%c0_32, %c0_33] : memref<32x3xf32, #tpu.memory_space<vmem>>, vector<32x3xf32>
      %c0_34 = arith.constant 0 : index
      %c0_35 = arith.constant 0 : index
      %54 = vector.load %arg6[%c0_34, %c0_35] : memref<3x64xf32, #tpu.memory_space<vmem>>, vector<3x64xf32>
      %cst_36 = arith.constant dense<0.000000e+00> : vector<32x64xf32>
      %55 = tpu.matmul %53, %54, %cst_36 {dimension_numbers = #tpu.dot_dimension_numbers<[1], [0], [0], [1], [0, 0, 1, 1], [], []>} : vector<32x3xf32>, vector<3x64xf32>, vector<32x64xf32> -> vector<32x64xf32>
      %c0_37 = arith.constant 0 : index
      %c0_38 = arith.constant 0 : index
      %56 = vector.load %arg8[%c0_37, %c0_38] : memref<32x1xf32, #tpu.memory_space<vmem>>, vector<32x1xf32>
      %57 = vector.broadcast %56 : vector<32x1xf32> to vector<32x64xf32>
      %58 = arith.addf %55, %57 : vector<32x64xf32>
      %c0_39 = arith.constant 0 : index
      %c0_40 = arith.constant 0 : index
      %59 = vector.load %arg16[%c0_39, %c0_40] : memref<32x64xf32, #tpu.memory_space<vmem>>, vector<32x64xf32>
      tpu.vector_store %arg16[%c0_39, %c0_40], %58 {strides = array<i32>} : memref<32x64xf32, #tpu.memory_space<vmem>>, vector<32x64xf32>,
    } else {
    }
    %c0_i32_2 = arith.constant 0 : i32
    %5 = arith.cmpi eq, %arg1, %c0_i32_2 : i32
    %6 = arith.extui %5 : i1 to i32
    %c0_i32_3 = arith.constant 0 : i32
    %7 = arith.cmpi ne, %6, %c0_i32_3 : i32
    scf.if %7 {
      %cst_32 = arith.constant 0.000000e+00 : f32
      %53 = vector.broadcast %cst_32 : f32 to vector<32x64xf32>
      %c0_33 = arith.constant 0 : index
      %c0_34 = arith.constant 0 : index
      %54 = vector.load %arg17[%c0_33, %c0_34] : memref<32x64xf32, #tpu.memory_space<vmem>>, vector<32x64xf32>
      tpu.vector_store %arg17[%c0_33, %c0_34], %53 {strides = array<i32>} : memref<32x64xf32, #tpu.memory_space<vmem>>, vector<32x64xf32>,
    } else {
    }
    %c0_i32_4 = arith.constant 0 : i32
    %8 = arith.cmpi eq, %arg1, %c0_i32_4 : i32
    %9 = arith.extui %8 : i1 to i32
    %c0_i32_5 = arith.constant 0 : i32
    %10 = arith.cmpi ne, %9, %c0_i32_5 : i32
    scf.if %10 {
      %c0_32 = arith.constant 0 : index
      %c0_33 = arith.constant 0 : index
      %53 = vector.load %arg16[%c0_32, %c0_33] : memref<32x64xf32, #tpu.memory_space<vmem>>, vector<32x64xf32>
      %54 = arith.truncf %53 : vector<32x64xf32> to vector<32x64xbf16>
      %c0_34 = arith.constant 0 : index
      %c0_35 = arith.constant 0 : index
      %55 = vector.load %arg18[%c0_34, %c0_35] : memref<32x64xbf16, #tpu.memory_space<vmem>>, vector<32x64xbf16>
      tpu.vector_store %arg18[%c0_34, %c0_35], %54 {strides = array<i32>} : memref<32x64xbf16, #tpu.memory_space<vmem>>, vector<32x64xbf16>,
    } else {
    }
    %c0 = arith.constant 0 : index
    %c0_6 = arith.constant 0 : index
    %11 = vector.load %arg18[%c0, %c0_6] : memref<32x64xbf16, #tpu.memory_space<vmem>>, vector<32x64xbf16>
    %c0_7 = arith.constant 0 : index
    %c0_8 = arith.constant 0 : index
    %12 = vector.load %arg9[%c0_7, %c0_8] : memref<8x7xf32, #tpu.memory_space<vmem>>, vector<8x7xf32>
    %c0_9 = arith.constant 0 : index
    %c0_10 = arith.constant 0 : index
    %13 = vector.load %arg4[%c0_9, %c0_10] : memref<7x128xf32, #tpu.memory_space<vmem>>, vector<7x128xf32>
    %cst = arith.constant dense<0.000000e+00> : vector<8x128xf32>
    %14 = tpu.matmul %12, %13, %cst {dimension_numbers = #tpu.dot_dimension_numbers<[1], [0], [0], [1], [0, 0, 1, 1], [], []>} : vector<8x7xf32>, vector<7x128xf32>, vector<8x128xf32> -> vector<8x128xf32>
    %c0_11 = arith.constant 0 : index
    %c0_12 = arith.constant 0 : index
    %15 = vector.load %arg10[%c0_11, %c0_12] : memref<8x1xf32, #tpu.memory_space<vmem>>, vector<8x1xf32>
    %16 = vector.broadcast %15 : vector<8x1xf32> to vector<8x128xf32>
    %17 = arith.addf %14, %16 : vector<8x128xf32>
    %cst_13 = arith.constant 0.000000e+00 : f32
    %18 = vector.broadcast %cst_13 : f32 to vector<8x128xf32>
    %19 = arith.maximumf %17, %18 : vector<8x128xf32>
    %c0_14 = arith.constant 0 : index
    %c0_15 = arith.constant 0 : index
    %20 = vector.load %arg11[%c0_14, %c0_15] : memref<32x8xf32, #tpu.memory_space<vmem>>, vector<32x8xf32>
    %cst_16 = arith.constant dense<0.000000e+00> : vector<32x128xf32>
    %21 = tpu.matmul %20, %19, %cst_16 {dimension_numbers = #tpu.dot_dimension_numbers<[1], [0], [0], [1], [0, 0, 1, 1], [], []>} : vector<32x8xf32>, vector<8x128xf32>, vector<32x128xf32> -> vector<32x128xf32>
    %c0_17 = arith.constant 0 : index
    %c0_18 = arith.constant 0 : index
    %22 = vector.load %arg12[%c0_17, %c0_18] : memref<32x1xf32, #tpu.memory_space<vmem>>, vector<32x1xf32>
    %23 = vector.broadcast %22 : vector<32x1xf32> to vector<32x128xf32>
    %24 = arith.addf %21, %23 : vector<32x128xf32>
    %25 = tpu.iota {dimensions = array<i32: 0>} : vector<64x128xi32>
    %c0_19 = arith.constant 0 : index
    %c0_20 = arith.constant 0 : index
    %26 = vector.load %arg2[%c0_19, %c0_20] : memref<1x128xi32, #tpu.memory_space<vmem>>, vector<1x128xi32>
    %27 = vector.broadcast %26 : vector<1x128xi32> to vector<64x128xi32>
    %28 = arith.cmpi eq, %25, %27 : vector<64x128xi32>
    %29 = arith.extui %28 : vector<64x128xi1> to vector<64x128xi32>
    %30 = arith.sitofp %29 : vector<64x128xi32> to vector<64x128xf32>
    %c0_21 = arith.constant 0 : index
    %c0_22 = arith.constant 0 : index
    %31 = vector.load %arg3[%c0_21, %c0_22] : memref<1x128xi32, #tpu.memory_space<vmem>>, vector<1x128xi32>
    %32 = vector.broadcast %31 : vector<1x128xi32> to vector<64x128xi32>
    %33 = arith.cmpi eq, %25, %32 : vector<64x128xi32>
    %34 = arith.extui %33 : vector<64x128xi1> to vector<64x128xi32>
    %35 = arith.sitofp %34 : vector<64x128xi32> to vector<64x128xf32>
    %36 = arith.truncf %30 : vector<64x128xf32> to vector<64x128xbf16>
    %37 = arith.truncf %35 : vector<64x128xf32> to vector<64x128xbf16>
    %cst_23 = arith.constant dense<0.000000e+00> : vector<32x128xf32>
    %38 = tpu.matmul %11, %36, %cst_23 {dimension_numbers = #tpu.dot_dimension_numbers<[1], [0], [0], [1], [0, 0, 1, 1], [], []>} : vector<32x64xbf16>, vector<64x128xbf16>, vector<32x128xf32> -> vector<32x128xf32>
    %39 = arith.mulf %38, %24 : vector<32x128xf32>
    %c0_24 = arith.constant 0 : index
    %c0_25 = arith.constant 0 : index
    %40 = vector.load %arg17[%c0_24, %c0_25] : memref<32x64xf32, #tpu.memory_space<vmem>>, vector<32x64xf32>
    %41 = arith.truncf %39 : vector<32x128xf32> to vector<32x128xbf16>
    %cst_26 = arith.constant dense<0.000000e+00> : vector<32x64xf32>
    %42 = tpu.matmul %41, %37, %cst_26 {dimension_numbers = #tpu.dot_dimension_numbers<[1], [1], [0], [0], [0, 0, 1, 0], [], []>} : vector<32x128xbf16>, vector<64x128xbf16>, vector<32x64xf32> -> vector<32x64xf32>
    %43 = arith.addf %40, %42 : vector<32x64xf32>
    %c0_27 = arith.constant 0 : index
    %c0_28 = arith.constant 0 : index
    %44 = vector.load %arg17[%c0_27, %c0_28] : memref<32x64xf32, #tpu.memory_space<vmem>>, vector<32x64xf32>
    tpu.vector_store %arg17[%c0_27, %c0_28], %43 {strides = array<i32>} : memref<32x64xf32, #tpu.memory_space<vmem>>, vector<32x64xf32>,
    %c1_i32 = arith.constant 1 : i32
    %45 = arith.cmpi eq, %arg1, %c1_i32 : i32
    %46 = arith.extui %45 : i1 to i32
    %c0_i32_29 = arith.constant 0 : i32
    %47 = arith.cmpi ne, %46, %c0_i32_29 : i32
    scf.if %47 {
      %c0_32 = arith.constant 0 : index
      %c0_33 = arith.constant 0 : index
      %53 = vector.load %arg17[%c0_32, %c0_33] : memref<32x64xf32, #tpu.memory_space<vmem>>, vector<32x64xf32>
      %c0_34 = arith.constant 0 : index
      %c0_35 = arith.constant 0 : index
      %54 = vector.load %arg5[%c0_34, %c0_35] : memref<1x64xf32, #tpu.memory_space<vmem>>, vector<1x64xf32>
      %55 = vector.broadcast %54 : vector<1x64xf32> to vector<32x64xf32>
      %56 = arith.mulf %53, %55 : vector<32x64xf32>
      %c0_36 = arith.constant 0 : index
      %c0_37 = arith.constant 0 : index
      %57 = vector.load %arg13[%c0_36, %c0_37] : memref<32x32xf32, #tpu.memory_space<vmem>>, vector<32x32xf32>
      %c0_38 = arith.constant 0 : index
      %c0_39 = arith.constant 0 : index
      %58 = vector.load %arg16[%c0_38, %c0_39] : memref<32x64xf32, #tpu.memory_space<vmem>>, vector<32x64xf32>
      %cst_40 = arith.constant dense<0.000000e+00> : vector<32x64xf32>
      %59 = tpu.matmul %57, %58, %cst_40 {dimension_numbers = #tpu.dot_dimension_numbers<[1], [0], [0], [1], [0, 0, 1, 1], [], []>} : vector<32x32xf32>, vector<32x64xf32>, vector<32x64xf32> -> vector<32x64xf32>
      %60 = arith.addf %56, %59 : vector<32x64xf32>
      %c0_41 = arith.constant 0 : index
      %c0_42 = arith.constant 0 : index
      %61 = vector.load %arg14[%c0_41, %c0_42] : memref<32x1xf32, #tpu.memory_space<vmem>>, vector<32x1xf32>
      %62 = vector.broadcast %61 : vector<32x1xf32> to vector<32x64xf32>
      %63 = arith.addf %60, %62 : vector<32x64xf32>
      %cst_43 = arith.constant 0.000000e+00 : f32
      %64 = vector.broadcast %cst_43 : f32 to vector<32x64xf32>
      %65 = arith.maximumf %63, %64 : vector<32x64xf32>
      %c0_44 = arith.constant 0 : index
      %c0_45 = arith.constant 0 : index
      %66 = vector.load %arg16[%c0_44, %c0_45] : memref<32x64xf32, #tpu.memory_space<vmem>>, vector<32x64xf32>
      tpu.vector_store %arg16[%c0_44, %c0_45], %65 {strides = array<i32>} : memref<32x64xf32, #tpu.memory_space<vmem>>, vector<32x64xf32>,
    } else {
    }
    %c3_i32 = arith.constant 3 : i32
    %48 = arith.cmpi eq, %arg0, %c3_i32 : i32
    %c1_i32_30 = arith.constant 1 : i32
    %49 = arith.cmpi eq, %arg1, %c1_i32_30 : i32
    %50 = arith.andi %48, %49 : i1
    %51 = arith.extui %50 : i1 to i32
    %c0_i32_31 = arith.constant 0 : i32
    %52 = arith.cmpi ne, %51, %c0_i32_31 : i32
    scf.if %52 {
      %c0_32 = arith.constant 0 : index
      %c0_33 = arith.constant 0 : index
      %53 = vector.load %arg16[%c0_32, %c0_33] : memref<32x64xf32, #tpu.memory_space<vmem>>, vector<32x64xf32>
      %c0_34 = arith.constant 0 : index
      %c0_35 = arith.constant 0 : index
      %54 = vector.load %arg15[%c0_34, %c0_35] : memref<32x64xf32, #tpu.memory_space<vmem>>, vector<32x64xf32>
      tpu.vector_store %arg15[%c0_34, %c0_35], %53 {strides = array<i32>} : memref<32x64xf32, #tpu.memory_space<vmem>>, vector<32x64xf32>,
    } else {
    }
    return
  }
  func.func @transform_0(%arg0: i32, %arg1: i32) -> (i32, i32) {
    %c0_i32 = arith.constant 0 : i32
    %c0_i32_0 = arith.constant 0 : i32
    return %c0_i32, %arg1 : i32, i32
  }
  func.func @transform_1(%arg0: i32, %arg1: i32) -> (i32, i32) {
    %c0_i32 = arith.constant 0 : i32
    %c0_i32_0 = arith.constant 0 : i32
    return %c0_i32, %arg1 : i32, i32
  }
  func.func @transform_2(%arg0: i32, %arg1: i32) -> (i32, i32) {
    %c0_i32 = arith.constant 0 : i32
    %c0_i32_0 = arith.constant 0 : i32
    return %c0_i32, %arg1 : i32, i32
  }
  func.func @transform_3(%arg0: i32, %arg1: i32) -> (i32, i32) {
    %c0_i32 = arith.constant 0 : i32
    %c0_i32_0 = arith.constant 0 : i32
    %c0_i32_1 = arith.constant 0 : i32
    return %c0_i32, %c0_i32_0 : i32, i32
  }
  func.func @transform_4(%arg0: i32, %arg1: i32) -> (i32, i32) {
    %c0_i32 = arith.constant 0 : i32
    %c0_i32_0 = arith.constant 0 : i32
    %c0_i32_1 = arith.constant 0 : i32
    return %c0_i32, %c0_i32_0 : i32, i32
  }
  func.func @transform_5(%arg0: i32, %arg1: i32) -> (i32, i32) {
    %c0_i32 = arith.constant 0 : i32
    %c0_i32_0 = arith.constant 0 : i32
    %c0_i32_1 = arith.constant 0 : i32
    return %c0_i32, %c0_i32_0 : i32, i32
  }
  func.func @transform_6(%arg0: i32, %arg1: i32) -> (i32, i32) {
    %c0_i32 = arith.constant 0 : i32
    %c0_i32_0 = arith.constant 0 : i32
    %c0_i32_1 = arith.constant 0 : i32
    return %c0_i32, %c0_i32_0 : i32, i32
  }
  func.func @transform_7(%arg0: i32, %arg1: i32) -> (i32, i32) {
    %c0_i32 = arith.constant 0 : i32
    %c0_i32_0 = arith.constant 0 : i32
    %c0_i32_1 = arith.constant 0 : i32
    return %c0_i32, %c0_i32_0 : i32, i32
  }
  func.func @transform_8(%arg0: i32, %arg1: i32) -> (i32, i32) {
    %c0_i32 = arith.constant 0 : i32
    %c0_i32_0 = arith.constant 0 : i32
    %c0_i32_1 = arith.constant 0 : i32
    return %c0_i32, %c0_i32_0 : i32, i32
  }
  func.func @transform_9(%arg0: i32, %arg1: i32) -> (i32, i32) {
    %c0_i32 = arith.constant 0 : i32
    %c0_i32_0 = arith.constant 0 : i32
    %c0_i32_1 = arith.constant 0 : i32
    return %c0_i32, %c0_i32_0 : i32, i32
  }
  func.func @transform_10(%arg0: i32, %arg1: i32) -> (i32, i32) {
    %c0_i32 = arith.constant 0 : i32
    %c0_i32_0 = arith.constant 0 : i32
    %c0_i32_1 = arith.constant 0 : i32
    return %c0_i32, %c0_i32_0 : i32, i32
  }
  func.func @transform_11(%arg0: i32, %arg1: i32) -> (i32, i32) {
    %c0_i32 = arith.constant 0 : i32
    %c0_i32_0 = arith.constant 0 : i32
    %c0_i32_1 = arith.constant 0 : i32
    return %c0_i32, %c0_i32_0 : i32, i32
  }
  func.func @transform_12(%arg0: i32, %arg1: i32) -> (i32, i32) {
    %c0_i32 = arith.constant 0 : i32
    %c0_i32_0 = arith.constant 0 : i32
    %c0_i32_1 = arith.constant 0 : i32
    return %c0_i32, %c0_i32_0 : i32, i32
  }
  func.func @transform_13(%arg0: i32, %arg1: i32) -> (i32, i32) {
    %c0_i32 = arith.constant 0 : i32
    %c0_i32_0 = arith.constant 0 : i32
    %c0_i32_1 = arith.constant 0 : i32
    return %c0_i32, %c0_i32_0 : i32, i32
  }
}

</mosaic_0001>

<llo_original>
// kernel: tpu_custom_call.1
$region0: #{tpu_custom_call.1}
  #allocation0 [shape = 'u32[]', space=smem, size = 0x4, offset = 0x4, fixed_abs, tag = 'smem constant byte address 0x4 - core index']
  #allocation1 [shape = 'u32[144,128]{1,0:T(1,128)}', space=vmem, size = 0x12000, scoped, tag = 'internal scratch']
  #allocation2 [shape = 'f32[32,64]{1,0:T(8,128)}', space=vmem, size = 0x4000, scoped, tag = 'scratch operand']
  #allocation3 [shape = 'f32[32,64]{1,0:T(8,128)}', space=vmem, size = 0x4000, scoped, tag = 'scratch operand']
  #allocation4 [shape = 'bf16[32,64]{1,0:T(8,128)(2,1)}', space=vmem, size = 0x2000, scoped, tag = 'scratch operand']
  %s0 = inlined_call_operand.vmem [shape: s32[1,256], index: 0, kind: input, shape index: {}]
  %s1 = inlined_call_operand.vmem [shape: s32[1,256], index: 1, kind: input, shape index: {}]
  %s2 = inlined_call_operand.vmem [shape: f32[7,256], index: 2, kind: input, shape index: {}]
  %s3 = inlined_call_operand.vmem [shape: f32[1,64], index: 3, kind: input, shape index: {}]
  %s4 = inlined_call_operand.vmem [shape: f32[3,64], index: 4, kind: input, shape index: {}]
  %s5 = inlined_call_operand.vmem [shape: f32[32,3], index: 5, kind: input, shape index: {}]
  %s6 = inlined_call_operand.vmem [shape: f32[32,1], index: 6, kind: input, shape index: {}]
  %s7 = inlined_call_operand.vmem [shape: f32[8,7], index: 7, kind: input, shape index: {}]
  %s8 = inlined_call_operand.vmem [shape: f32[8,1], index: 8, kind: input, shape index: {}]
  %s9 = inlined_call_operand.vmem [shape: f32[32,8], index: 9, kind: input, shape index: {}]
  %s10 = inlined_call_operand.vmem [shape: f32[32,1], index: 10, kind: input, shape index: {}]
  %s11 = inlined_call_operand.vmem [shape: f32[32,32], index: 11, kind: input, shape index: {}]
  %s12 = inlined_call_operand.vmem [shape: f32[32,1], index: 12, kind: input, shape index: {}]
  %s13 = inlined_call_operand.hbm [shape: f32[32,64], index: 13, kind: output, shape index: {}]
  %s14 = sld [smem:[#allocation0]]
  $region101: #{tpu_custom_call.1} parent=0
    _
  %s16 = ssub.s32 1, %s14
  %s17 = scalar_select 0, %s16, %s14
  $region1: #{tpu_custom_call.1} parent=0
    #allocation5 [shape = 'u8[16384]{0}', space=vmem, size = 0x4000, scoped, tag = 'output window, operand 0, single buffered']
    #allocation6 [shape = 's32[2]{0}', space=sflag, size = 0x8, scoped, tag = 'scoped memory for tpu_custom_call.1']
    %18 = vsyncpa [#allocation6], 0
    loop: start=0, step=1, limit=10
    $region2: #{tpu_custom_call.1} parent=1 // loop_pre_header
      _
    $region3: #{tpu_custom_call.1} parent=1 // loop_header
      %s20 = sphi 0, %s24
      %p21 = scmp.ge.s32.totalorder %s20, 10
      %s27 = sphi 0, %s39
      %s28 = sphi 0, %s35
      %s29 = sphi 0, %s27
      %s30 = sphi 0, %s28
      %s31 = sphi 0, %s29
      %s32 = sphi 0, %s30
      %s42 = sphi 0, %s44
      %s45 = sphi 0, %s42
      %s46 = sphi 0, %s45
      %s62 = sphi 0, %s46
      %s68 = sphi 0, %s70
      %s71 = sphi 0, %s68
      %s72 = sphi 0, %s71
      %s88 = sphi 0, %s72
      %s94 = sphi 0, %s96
      %s97 = sphi 0, %s94
      %s98 = sphi 0, %s97
      %s114 = sphi 0, %s98
      %s118 = sphi 0, %s118
      %s120 = sphi 0, %s118
      %s121 = sphi 0, %s120
      %s135 = sphi 0, %s121
      %s139 = sphi 0, %s139
      %s141 = sphi 0, %s139
      %s142 = sphi 0, %s141
      %s156 = sphi 0, %s142
      %s160 = sphi 0, %s160
      %s162 = sphi 0, %s160
      %s163 = sphi 0, %s162
      %s177 = sphi 0, %s163
      %s181 = sphi 0, %s181
      %s183 = sphi 0, %s181
      %s184 = sphi 0, %s183
      %s198 = sphi 0, %s184
      %s202 = sphi 0, %s202
      %s204 = sphi 0, %s202
      %s205 = sphi 0, %s204
      %s219 = sphi 0, %s205
      %s223 = sphi 0, %s223
      %s225 = sphi 0, %s223
      %s226 = sphi 0, %s225
      %s240 = sphi 0, %s226
      %s244 = sphi 0, %s244
      %s246 = sphi 0, %s244
      %s247 = sphi 0, %s246
      %s261 = sphi 0, %s247
      %s265 = sphi 0, %s265
      %s267 = sphi 0, %s265
      %s268 = sphi 0, %s267
      %s282 = sphi 0, %s268
      %s286 = sphi 0, %s286
      %s288 = sphi 0, %s286
      %s289 = sphi 0, %s288
      %s303 = sphi 0, %s289
      %s307 = sphi 0, %s307
      %s309 = sphi 0, %s307
      %s310 = sphi 0, %s309
      %s324 = sphi 0, %s310
      %s328 = sphi 0, %s328
      %s330 = sphi 0, %s328
      %s331 = sphi 0, %s330
      %s345 = sphi 0, %s331
    $region4: #{tpu_custom_call.1} parent=1 // loop_header_branch
      %23 = sbr.rel (%p21) target = $region8
    $region5: #{tpu_custom_call.1} parent=1 // loop_body
      %s25 = ssub.s32 %s20, 1
      %s26 = ssub.s32 %s20, 2
      %s33 = sadd.s32 1, %s28
      %p34 = scmp.ge.s32.totalorder %s33, 2
      %s35 = scalar_select %p34, 0, %s33
      %s36 = sadd.s32 1, %s27
      %s37 = scalar_select %p34, %s36, %s27
      %p38 = scmp.ge.s32.totalorder %s37, 4
      %s39 = scalar_select %p38, 0, %s37
      %s40 = ssub.s32 %s28, %s35
      %p41 = scmp.eq.s32.totalorder %s40, 0
      %s43 = sadd.s32 %s42, 1
      %s44 = scalar_select %p41, %s42, %s43
      %p47 = pneg %p41
      %p48 = scmp.eq.s32.totalorder %s20, 7
      %p49 = por %p47, %p48
      %p50 = scmp.ne.s32.totalorder %s42, %s45
      %p51 = scmp.eq.s32.totalorder %s20, 0
      %p52 = por %p50, %p51
      %p53 = scmp.ne.s32.totalorder %s42, %s45
      %p54 = scmp.eq.s32.totalorder %s25, 7
      %p55 = por %p53, %p54
      %p56 = scmp.ne.s32.totalorder %s45, %s46
      %p57 = scmp.eq.s32.totalorder %s25, 0
      %p58 = por %p56, %p57
      %p59 = scmp.ne.s32.totalorder %s45, %s46
      %p60 = scmp.eq.s32.totalorder %s26, 7
      %p61 = por %p59, %p60
      %p63 = scmp.ne.s32.totalorder %s46, %s62
      %p64 = scmp.eq.s32.totalorder %s26, 0
      %p65 = por %p63, %p64
      %s66 = ssub.s32 %s28, %s35
      %p67 = scmp.eq.s32.totalorder %s66, 0
      %s69 = sadd.s32 %s68, 1
      %s70 = scalar_select %p67, %s68, %s69
      %p73 = pneg %p67
      %p74 = scmp.eq.s32.totalorder %s20, 7
      %p75 = por %p73, %p74
      %p76 = scmp.ne.s32.totalorder %s68, %s71
      %p77 = scmp.eq.s32.totalorder %s20, 0
      %p78 = por %p76, %p77
      %p79 = scmp.ne.s32.totalorder %s68, %s71
      %p80 = scmp.eq.s32.totalorder %s25, 7
      %p81 = por %p79, %p80
      %p82 = scmp.ne.s32.totalorder %s71, %s72
      %p83 = scmp.eq.s32.totalorder %s25, 0
      %p84 = por %p82, %p83
      %p85 = scmp.ne.s32.totalorder %s71, %s72
      %p86 = scmp.eq.s32.totalorder %s26, 7
      %p87 = por %p85, %p86
      %p89 = scmp.ne.s32.totalorder %s72, %s88
      %p90 = scmp.eq.s32.totalorder %s26, 0
      %p91 = por %p89, %p90
      %s92 = ssub.s32 %s28, %s35
      %p93 = scmp.eq.s32.totalorder %s92, 0
      %s95 = sadd.s32 %s94, 1
      %s96 = scalar_select %p93, %s94, %s95
      %p99 = pneg %p93
      %p100 = scmp.eq.s32.totalorder %s20, 7
      %p101 = por %p99, %p100
      %p102 = scmp.ne.s32.totalorder %s94, %s97
      %p103 = scmp.eq.s32.totalorder %s20, 0
      %p104 = por %p102, %p103
      %p105 = scmp.ne.s32.totalorder %s94, %s97
      %p106 = scmp.eq.s32.totalorder %s25, 7
      %p107 = por %p105, %p106
      %p108 = scmp.ne.s32.totalorder %s97, %s98
      %p109 = scmp.eq.s32.totalorder %s25, 0
      %p110 = por %p108, %p109
      %p111 = scmp.ne.s32.totalorder %s97, %s98
      %p112 = scmp.eq.s32.totalorder %s26, 7
      %p113 = por %p111, %p112
      %p115 = scmp.ne.s32.totalorder %s98, %s114
      %p116 = scmp.eq.s32.totalorder %s26, 0
      %p117 = por %p115, %p116
      %s119 = sadd.s32 %s118, 1
      %p122 = scmp.eq.s32.totalorder %s20, 7
      %p123 = scmp.ne.s32.totalorder %s118, %s120
      %p124 = scmp.eq.s32.totalorder %s20, 0
      %p125 = por %p123, %p124
      %p126 = scmp.ne.s32.totalorder %s118, %s120
      %p127 = scmp.eq.s32.totalorder %s25, 7
      %p128 = por %p126, %p127
      %p129 = scmp.ne.s32.totalorder %s120, %s121
      %p130 = scmp.eq.s32.totalorder %s25, 0
      %p131 = por %p129, %p130
      %p132 = scmp.ne.s32.totalorder %s120, %s121
      %p133 = scmp.eq.s32.totalorder %s26, 7
      %p134 = por %p132, %p133
      %p136 = scmp.ne.s32.totalorder %s121, %s135
      %p137 = scmp.eq.s32.totalorder %s26, 0
      %p138 = por %p136, %p137
      %s140 = sadd.s32 %s139, 1
      %p143 = scmp.eq.s32.totalorder %s20, 7
      %p144 = scmp.ne.s32.totalorder %s139, %s141
      %p145 = scmp.eq.s32.totalorder %s20, 0
      %p146 = por %p144, %p145
      %p147 = scmp.ne.s32.totalorder %s139, %s141
      %p148 = scmp.eq.s32.totalorder %s25, 7
      %p149 = por %p147, %p148
      %p150 = scmp.ne.s32.totalorder %s141, %s142
      %p151 = scmp.eq.s32.totalorder %s25, 0
      %p152 = por %p150, %p151
      %p153 = scmp.ne.s32.totalorder %s141, %s142
      %p154 = scmp.eq.s32.totalorder %s26, 7
      %p155 = por %p153, %p154
      %p157 = scmp.ne.s32.totalorder %s142, %s156
      %p158 = scmp.eq.s32.totalorder %s26, 0
      %p159 = por %p157, %p158
      %s161 = sadd.s32 %s160, 1
      %p164 = scmp.eq.s32.totalorder %s20, 7
      %p165 = scmp.ne.s32.totalorder %s160, %s162
      %p166 = scmp.eq.s32.totalorder %s20, 0
      %p167 = por %p165, %p166
      %p168 = scmp.ne.s32.totalorder %s160, %s162
      %p169 = scmp.eq.s32.totalorder %s25, 7
      %p170 = por %p168, %p169
      %p171 = scmp.ne.s32.totalorder %s162, %s163
      %p172 = scmp.eq.s32.totalorder %s25, 0
      %p173 = por %p171, %p172
      %p174 = scmp.ne.s32.totalorder %s162, %s163
      %p175 = scmp.eq.s32.totalorder %s26, 7
      %p176 = por %p174, %p175
      %p178 = scmp.ne.s32.totalorder %s163, %s177
      %p179 = scmp.eq.s32.totalorder %s26, 0
      %p180 = por %p178, %p179
      %s182 = sadd.s32 %s181, 1
      %p185 = scmp.eq.s32.totalorder %s20, 7
      %p186 = scmp.ne.s32.totalorder %s181, %s183
      %p187 = scmp.eq.s32.totalorder %s20, 0
      %p188 = por %p186, %p187
      %p189 = scmp.ne.s32.totalorder %s181, %s183
      %p190 = scmp.eq.s32.totalorder %s25, 7
      %p191 = por %p189, %p190
      %p192 = scmp.ne.s32.totalorder %s183, %s184
      %p193 = scmp.eq.s32.totalorder %s25, 0
      %p194 = por %p192, %p193
      %p195 = scmp.ne.s32.totalorder %s183, %s184
      %p196 = scmp.eq.s32.totalorder %s26, 7
      %p197 = por %p195, %p196
      %p199 = scmp.ne.s32.totalorder %s184, %s198
      %p200 = scmp.eq.s32.totalorder %s26, 0
      %p201 = por %p199, %p200
      %s203 = sadd.s32 %s202, 1
      %p206 = scmp.eq.s32.totalorder %s20, 7
      %p207 = scmp.ne.s32.totalorder %s202, %s204
      %p208 = scmp.eq.s32.totalorder %s20, 0
      %p209 = por %p207, %p208
      %p210 = scmp.ne.s32.totalorder %s202, %s204
      %p211 = scmp.eq.s32.totalorder %s25, 7
      %p212 = por %p210, %p211
      %p213 = scmp.ne.s32.totalorder %s204, %s205
      %p214 = scmp.eq.s32.totalorder %s25, 0
      %p215 = por %p213, %p214
      %p216 = scmp.ne.s32.totalorder %s204, %s205
      %p217 = scmp.eq.s32.totalorder %s26, 7
      %p218 = por %p216, %p217
      %p220 = scmp.ne.s32.totalorder %s205, %s219
      %p221 = scmp.eq.s32.totalorder %s26, 0
      %p222 = por %p220, %p221
      %s224 = sadd.s32 %s223, 1
      %p227 = scmp.eq.s32.totalorder %s20, 7
      %p228 = scmp.ne.s32.totalorder %s223, %s225
      %p229 = scmp.eq.s32.totalorder %s20, 0
      %p230 = por %p228, %p229
      %p231 = scmp.ne.s32.totalorder %s223, %s225
      %p232 = scmp.eq.s32.totalorder %s25, 7
      %p233 = por %p231, %p232
      %p234 = scmp.ne.s32.totalorder %s225, %s226
      %p235 = scmp.eq.s32.totalorder %s25, 0
      %p236 = por %p234, %p235
      %p237 = scmp.ne.s32.totalorder %s225, %s226
      %p238 = scmp.eq.s32.totalorder %s26, 7
      %p239 = por %p237, %p238
      %p241 = scmp.ne.s32.totalorder %s226, %s240
      %p242 = scmp.eq.s32.totalorder %s26, 0
      %p243 = por %p241, %p242
      %s245 = sadd.s32 %s244, 1
      %p248 = scmp.eq.s32.totalorder %s20, 7
      %p249 = scmp.ne.s32.totalorder %s244, %s246
      %p250 = scmp.eq.s32.totalorder %s20, 0
      %p251 = por %p249, %p250
      %p252 = scmp.ne.s32.totalorder %s244, %s246
      %p253 = scmp.eq.s32.totalorder %s25, 7
      %p254 = por %p252, %p253
      %p255 = scmp.ne.s32.totalorder %s246, %s247
      %p256 = scmp.eq.s32.totalorder %s25, 0
      %p257 = por %p255, %p256
      %p258 = scmp.ne.s32.totalorder %s246, %s247
      %p259 = scmp.eq.s32.totalorder %s26, 7
      %p260 = por %p258, %p259
      %p262 = scmp.ne.s32.totalorder %s247, %s261
      %p263 = scmp.eq.s32.totalorder %s26, 0
      %p264 = por %p262, %p263
      %s266 = sadd.s32 %s265, 1
      %p269 = scmp.eq.s32.totalorder %s20, 7
      %p270 = scmp.ne.s32.totalorder %s265, %s267
      %p271 = scmp.eq.s32.totalorder %s20, 0
      %p272 = por %p270, %p271
      %p273 = scmp.ne.s32.totalorder %s265, %s267
      %p274 = scmp.eq.s32.totalorder %s25, 7
      %p275 = por %p273, %p274
      %p276 = scmp.ne.s32.totalorder %s267, %s268
      %p277 = scmp.eq.s32.totalorder %s25, 0
      %p278 = por %p276, %p277
      %p279 = scmp.ne.s32.totalorder %s267, %s268
      %p280 = scmp.eq.s32.totalorder %s26, 7
      %p281 = por %p279, %p280
      %p283 = scmp.ne.s32.totalorder %s268, %s282
      %p284 = scmp.eq.s32.totalorder %s26, 0
      %p285 = por %p283, %p284
      %s287 = sadd.s32 %s286, 1
      %p290 = scmp.eq.s32.totalorder %s20, 7
      %p291 = scmp.ne.s32.totalorder %s286, %s288
      %p292 = scmp.eq.s32.totalorder %s20, 0
      %p293 = por %p291, %p292
      %p294 = scmp.ne.s32.totalorder %s286, %s288
      %p295 = scmp.eq.s32.totalorder %s25, 7
      %p296 = por %p294, %p295
      %p297 = scmp.ne.s32.totalorder %s288, %s289
      %p298 = scmp.eq.s32.totalorder %s25, 0
      %p299 = por %p297, %p298
      %p300 = scmp.ne.s32.totalorder %s288, %s289
      %p301 = scmp.eq.s32.totalorder %s26, 7
      %p302 = por %p300, %p301
      %p304 = scmp.ne.s32.totalorder %s289, %s303
      %p305 = scmp.eq.s32.totalorder %s26, 0
      %p306 = por %p304, %p305
      %s308 = sadd.s32 %s307, 1
      %p311 = scmp.eq.s32.totalorder %s20, 7
      %p312 = scmp.ne.s32.totalorder %s307, %s309
      %p313 = scmp.eq.s32.totalorder %s20, 0
      %p314 = por %p312, %p313
      %p315 = scmp.ne.s32.totalorder %s307, %s309
      %p316 = scmp.eq.s32.totalorder %s25, 7
      %p317 = por %p315, %p316
      %p318 = scmp.ne.s32.totalorder %s309, %s310
      %p319 = scmp.eq.s32.totalorder %s25, 0
      %p320 = por %p318, %p319
      %p321 = scmp.ne.s32.totalorder %s309, %s310
      %p322 = scmp.eq.s32.totalorder %s26, 7
      %p323 = por %p321, %p322
      %p325 = scmp.ne.s32.totalorder %s310, %s324
      %p326 = scmp.eq.s32.totalorder %s26, 0
      %p327 = por %p325, %p326
      %s329 = sadd.s32 %s328, 1
      %p332 = scmp.eq.s32.totalorder %s20, 7
      %p333 = scmp.ne.s32.totalorder %s328, %s330
      %p334 = scmp.eq.s32.totalorder %s20, 0
      %p335 = por %p333, %p334
      %p336 = scmp.ne.s32.totalorder %s328, %s330
      %p337 = scmp.eq.s32.totalorder %s25, 7
      %p338 = por %p336, %p337
      %p339 = scmp.ne.s32.totalorder %s330, %s331
      %p340 = scmp.eq.s32.totalorder %s25, 0
      %p341 = por %p339, %p340
      %p342 = scmp.ne.s32.totalorder %s330, %s331
      %p343 = scmp.eq.s32.totalorder %s26, 7
      %p344 = por %p342, %p343
      %p346 = scmp.ne.s32.totalorder %s331, %s345
      %p347 = scmp.eq.s32.totalorder %s26, 0
      %p348 = por %p346, %p347
      %p349 = scmp.le.s32.totalorder 1, %s20
      %p350 = scmp.lt.s32.totalorder %s20, 9
      %p351 = pnand %p349, %p350
      %p352 = pneg %p351
      // Predicated region
      $region9: #{tpu_custom_call.1} parent=5 // pred_check
        _
      $region10: #{tpu_custom_call.1} parent=5 // pred_check_branch
        %354 = sbr.rel (%p351) target = $region12
      $region11: #{tpu_custom_call.1} parent=5 // pred_region
        %s355 = ssub.s32 %s20, 1
        // Predicated region
        $region13: #{tpu_custom_call.1} parent=11 // pred_check
          %p356 = pneg %p131
        $region14: #{tpu_custom_call.1} parent=11 // pred_check_branch
          %358 = sbr.rel (%p356) target = $region16
        $region15: #{tpu_custom_call.1} parent=11 // pred_region
          _
        $region16: #{tpu_custom_call.1} parent=11 // pred_fallthru
          _
        // Predicated region
        $region17: #{tpu_custom_call.1} parent=11 // pred_check
          %p359 = pneg %p152
        $region18: #{tpu_custom_call.1} parent=11 // pred_check_branch
          %361 = sbr.rel (%p359) target = $region20
        $region19: #{tpu_custom_call.1} parent=11 // pred_region
          _
        $region20: #{tpu_custom_call.1} parent=11 // pred_fallthru
          _
        // Predicated region
        $region21: #{tpu_custom_call.1} parent=11 // pred_check
          %p362 = pneg %p173
        $region22: #{tpu_custom_call.1} parent=11 // pred_check_branch
          %364 = sbr.rel (%p362) target = $region24
        $region23: #{tpu_custom_call.1} parent=11 // pred_region
          _
        $region24: #{tpu_custom_call.1} parent=11 // pred_fallthru
          _
        // Predicated region
        $region25: #{tpu_custom_call.1} parent=11 // pred_check
          %p365 = pneg %p194
        $region26: #{tpu_custom_call.1} parent=11 // pred_check_branch
          %367 = sbr.rel (%p365) target = $region28
        $region27: #{tpu_custom_call.1} parent=11 // pred_region
          _
        $region28: #{tpu_custom_call.1} parent=11 // pred_fallthru
          _
        // Predicated region
        $region29: #{tpu_custom_call.1} parent=11 // pred_check
          %p368 = pneg %p215
        $region30: #{tpu_custom_call.1} parent=11 // pred_check_branch
          %370 = sbr.rel (%p368) target = $region32
        $region31: #{tpu_custom_call.1} parent=11 // pred_region
          _
        $region32: #{tpu_custom_call.1} parent=11 // pred_fallthru
          _
        // Predicated region
        $region33: #{tpu_custom_call.1} parent=11 // pred_check
          %p371 = pneg %p236
        $region34: #{tpu_custom_call.1} parent=11 // pred_check_branch
          %373 = sbr.rel (%p371) target = $region36
        $region35: #{tpu_custom_call.1} parent=11 // pred_region
          _
        $region36: #{tpu_custom_call.1} parent=11 // pred_fallthru
          _
        // Predicated region
        $region37: #{tpu_custom_call.1} parent=11 // pred_check
          %p374 = pneg %p257
        $region38: #{tpu_custom_call.1} parent=11 // pred_check_branch
          %376 = sbr.rel (%p374) target = $region40
        $region39: #{tpu_custom_call.1} parent=11 // pred_region
          _
        $region40: #{tpu_custom_call.1} parent=11 // pred_fallthru
          _
        // Predicated region
        $region41: #{tpu_custom_call.1} parent=11 // pred_check
          %p377 = pneg %p278
        $region42: #{tpu_custom_call.1} parent=11 // pred_check_branch
          %379 = sbr.rel (%p377) target = $region44
        $region43: #{tpu_custom_call.1} parent=11 // pred_region
          _
        $region44: #{tpu_custom_call.1} parent=11 // pred_fallthru
          _
        // Predicated region
        $region45: #{tpu_custom_call.1} parent=11 // pred_check
          %p380 = pneg %p299
        $region46: #{tpu_custom_call.1} parent=11 // pred_check_branch
          %382 = sbr.rel (%p380) target = $region48
        $region47: #{tpu_custom_call.1} parent=11 // pred_region
          _
        $region48: #{tpu_custom_call.1} parent=11 // pred_fallthru
          _
        // Predicated region
        $region49: #{tpu_custom_call.1} parent=11 // pred_check
          %p383 = pneg %p320
        $region50: #{tpu_custom_call.1} parent=11 // pred_check_branch
          %385 = sbr.rel (%p383) target = $region52
        $region51: #{tpu_custom_call.1} parent=11 // pred_region
          _
        $region52: #{tpu_custom_call.1} parent=11 // pred_fallthru
          _
      $region12: #{tpu_custom_call.1} parent=5 // pred_fallthru
        _
      %p386 = scmp.lt.s32.totalorder %s20, 8
      // Predicated region
      $region53: #{tpu_custom_call.1} parent=5 // pred_check
        %p387 = pneg %p386
      $region54: #{tpu_custom_call.1} parent=5 // pred_check_branch
        %389 = sbr.rel (%p387) target = $region56
      $region55: #{tpu_custom_call.1} parent=5 // pred_region
        // Predicated region
        $region57: #{tpu_custom_call.1} parent=55 // pred_check
          %p390 = pneg %p52
        $region58: #{tpu_custom_call.1} parent=55 // pred_check_branch
          %392 = sbr.rel (%p390) target = $region60
        $region59: #{tpu_custom_call.1} parent=55 // pred_region
          %p393 = scmp.lt.s32.totalorder %s28, 1
          %s394 = scalar_select %p393, %s28, 1
          %s395 = scalar_lea.vmem %s0, %s394
        $region60: #{tpu_custom_call.1} parent=55 // pred_fallthru
          _
        // Predicated region
        $region61: #{tpu_custom_call.1} parent=55 // pred_check
          %p396 = pneg %p78
        $region62: #{tpu_custom_call.1} parent=55 // pred_check_branch
          %398 = sbr.rel (%p396) target = $region64
        $region63: #{tpu_custom_call.1} parent=55 // pred_region
          %p399 = scmp.lt.s32.totalorder %s28, 1
          %s400 = scalar_select %p399, %s28, 1
          %s401 = scalar_lea.vmem %s1, %s400
        $region64: #{tpu_custom_call.1} parent=55 // pred_fallthru
          _
        // Predicated region
        $region65: #{tpu_custom_call.1} parent=55 // pred_check
          %p402 = pneg %p104
        $region66: #{tpu_custom_call.1} parent=55 // pred_check_branch
          %404 = sbr.rel (%p402) target = $region68
        $region67: #{tpu_custom_call.1} parent=55 // pred_region
          %p405 = scmp.lt.s32.totalorder %s28, 1
          %s406 = scalar_select %p405, %s28, 1
          %s407 = smul.addr %s406, 8
          %s408 = scalar_lea.vmem %s2, %s407
        $region68: #{tpu_custom_call.1} parent=55 // pred_fallthru
          _
      $region56: #{tpu_custom_call.1} parent=5 // pred_fallthru
        _
      %p409 = scmp.le.s32.totalorder 1, %s20
      %p410 = scmp.lt.s32.totalorder %s20, 9
      %p411 = pnand %p409, %p410
      %p412 = pneg %p411
      // Predicated region
      $region69: #{tpu_custom_call.1} parent=5 // pred_check
        _
      $region70: #{tpu_custom_call.1} parent=5 // pred_check_branch
        %414 = sbr.rel (%p411) target = $region72
      $region71: #{tpu_custom_call.1} parent=5 // pred_region
        %s415 = ssub.s32 %s20, 1
        %p416 = scmp.lt.s32.totalorder %s30, 1
        %s417 = scalar_select %p416, %s30, 1
        %s418 = scalar_lea.vmem %s0, %s417
        %p419 = pneg %p58
        %p420 = pneg %p55
        %p421 = scmp.lt.s32.totalorder %s30, 1
        %s422 = scalar_select %p421, %s30, 1
        %s423 = scalar_lea.vmem %s1, %s422
        %p424 = pneg %p84
        %p425 = pneg %p81
        %p426 = scmp.lt.s32.totalorder %s30, 1
        %s427 = scalar_select %p426, %s30, 1
        %s428 = smul.addr %s427, 8
        %s429 = scalar_lea.vmem %s2, %s428
        %p430 = pneg %p110
        %p431 = pneg %p107
        %p432 = pneg %p131
        %p433 = pneg %p128
        %p434 = pneg %p152
        %p435 = pneg %p149
        %p436 = pneg %p173
        %p437 = pneg %p170
        %p438 = pneg %p194
        %p439 = pneg %p191
        %p440 = pneg %p215
        %p441 = pneg %p212
        %p442 = pneg %p236
        %p443 = pneg %p233
        %p444 = pneg %p257
        %p445 = pneg %p254
        %p446 = pneg %p278
        %p447 = pneg %p275
        %p448 = pneg %p299
        %p449 = pneg %p296
        %p450 = pneg %p320
        %p451 = pneg %p317
        %p452 = pneg %p341
        %p453 = pneg %p338
        %p454 = scmp.lt.s32.totalorder %s30, 1
        %s455 = scalar_select %p454, %s30, 1
        %s456 = scalar_lea.vmem %s0, %s455
        %p457 = scmp.lt.s32.totalorder %s30, 1
        %s458 = scalar_select %p457, %s30, 1
        %s459 = scalar_lea.vmem %s1, %s458
        %p460 = scmp.lt.s32.totalorder %s30, 1
        %s461 = scalar_select %p460, %s30, 1
        %s462 = smul.addr %s461, 8
        %s463 = scalar_lea.vmem %s2, %s462
        %p465 = scmp.eq.s32.totalorder %s29, 0
        %p466 = scmp.eq.s32.totalorder %s30, 0
        %p467 = pnand %p465, %p466
        %p468 = pneg %p467
        // Predicated region
        $region73: #{tpu_custom_call.1} parent=71 // pred_check
          _
        $region74: #{tpu_custom_call.1} parent=71 // pred_check_branch
          %470 = sbr.rel (%p467) target = $region76
        $region75: #{tpu_custom_call.1} parent=71 // pred_region
          %v471 = vld [vmem:[%s5] sm:$0xff]
          %v472 = vld [vmem:[%s5 + $0x8] sm:$0xff]
          %v473 = vld [vmem:[%s5 + $0x10] sm:$0xff]
          %v474 = vld [vmem:[%s5 + $0x18] sm:$0xff]
          %v475 = vld [vmem:[%s4] sm:$0x7]
          %v476 = vld [vmem:[%s6] sm:$0xff]
          %v477 = vld [vmem:[%s6 + $0x8] sm:$0xff]
          %v478 = vld [vmem:[%s6 + $0x10] sm:$0xff]
          %v479 = vld [vmem:[%s6 + $0x18] sm:$0xff]
          %481 = vset.pattern.permute.xlu0 0
          %482 = vperm.xlu0 %481, %v476
          %v483 = vpop.permute.xlu0 %482
          %486 = vset.pattern.permute.xlu0 0
          %487 = vperm.xlu0 %486, %v477
          %v488 = vpop.permute.xlu0 %487
          %491 = vset.pattern.permute.xlu0 0
          %492 = vperm.xlu0 %491, %v478
          %v493 = vpop.permute.xlu0 %492
          %496 = vset.pattern.permute.xlu0 0
          %497 = vperm.xlu0 %496, %v479
          %v498 = vpop.permute.xlu0 %497
          %vm500 = vcmask 23552
          %v502 = vsel %vm500, %v471, 0
          %v505 = vsel %vm500, %v472, 0
          %v508 = vsel %vm500, %v473, 0
          %v511 = vsel %vm500, %v474, 0
          %vm513 = vcmask 1042432
          %v515 = vsel %vm513, %v475, 0
          %517 = vmatprep.subr.mxu0 0.0
          %518 = vmatpush1.msra.mxu0 0.0
          %519 = vmatprep.subr.mxu0 0.0
          %520 = vmatpush1.msra.mxu0 0.0
          %521 = vmatprep.subr.mxu0 0.0
          %522 = vmatpush1.msra.mxu0 0.0
          %523 = vmatprep.subr.mxu0 0.0
          %524 = vmatpush1.msra.mxu0 0.0
          %525 = vmatprep.subr.mxu0 0.0
          %526 = vmatpush1.msra.mxu0 0.0
          %527 = vmatprep.subr.mxu0 0.0
          %528 = vmatpush1.msra.mxu0 0.0
          %529 = vmatprep.subr.mxu0 0.0
          %530 = vmatpush1.msra.mxu0 0.0
          %531 = vmatprep.subr.mxu0 0.0
          %532 = vmatpush1.msra.mxu0 0.0
          %533 = vmatprep.subr.mxu0 0.0
          %534 = vmatpush1.msra.mxu0 0.0
          %535 = vmatprep.subr.mxu0 0.0
          %536 = vmatpush1.msra.mxu0 0.0
          %537 = vmatprep.subr.mxu0 0.0
          %538 = vmatpush1.msra.mxu0 0.0
          %539 = vmatprep.subr.mxu0 0.0
          %540 = vmatpush1.msra.mxu0 0.0
          %541 = vmatprep.subr.mxu0 0.0
          %542 = vmatpush1.msra.mxu0 0.0
          %543 = vmatprep.subr.mxu0 0.0
          %544 = vmatpush1.msra.mxu0 0.0
          %545 = vmatprep.subr.mxu0 0.0
          %546 = vmatpush1.msra.mxu0 0.0
          %547 = vmatprep.subr.mxu0 0.0
          %548 = vmatpush1.msra.mxu0 %v515
          %549 = vmatprep.subr.mxu0 0.0
          %550 = vmatpush2.msra.mxu0 0.0
          %551 = vmatprep.subr.mxu0 0.0
          %552 = vmatpush2.msra.mxu0 0.0
          %553 = vmatprep.subr.mxu0 0.0
          %554 = vmatpush2.msra.mxu0 0.0
          %555 = vmatprep.subr.mxu0 0.0
          %556 = vmatpush2.msra.mxu0 0.0
          %557 = vmatprep.subr.mxu0 0.0
          %558 = vmatpush2.msra.mxu0 0.0
          %559 = vmatprep.subr.mxu0 0.0
          %560 = vmatpush2.msra.mxu0 0.0
          %561 = vmatprep.subr.mxu0 0.0
          %562 = vmatpush2.msra.mxu0 0.0
          %563 = vmatprep.subr.mxu0 0.0
          %564 = vmatpush2.msra.mxu0 0.0
          %565 = vmatprep.subr.mxu0 0.0
          %566 = vmatpush2.msra.mxu0 0.0
          %567 = vmatprep.subr.mxu0 0.0
          %568 = vmatpush2.msra.mxu0 0.0
          %569 = vmatprep.subr.mxu0 0.0
          %570 = vmatpush2.msra.mxu0 0.0
          %571 = vmatprep.subr.mxu0 0.0
          %572 = vmatpush2.msra.mxu0 0.0
          %573 = vmatprep.subr.mxu0 0.0
          %574 = vmatpush2.msra.mxu0 0.0
          %575 = vmatprep.subr.mxu0 0.0
          %576 = vmatpush2.msra.mxu0 0.0
          %577 = vmatprep.subr.mxu0 0.0
          %578 = vmatpush2.msra.mxu0 0.0
          %579 = vmatprep.subr.mxu0 0.0
          %580 = vmatpush2.msra.mxu0 0.0
          %581 = vmatprep.mubr.f32.mxu0 0.0
          %582 = vmatmul.mubr.f32.gmra.mxu0 %v502
          %v583 = vpop.f32.mrf.mxu0
          %v584 = vadd.f32 %v483, %v583
          %v585 = vpop.f32.mrf.mxu0
          %586 = vmatprep.mubr.f32.mxu0 0.0
          %587 = vmatmul.mubr.f32.gmra.mxu0 %v505
          %v588 = vpop.f32.mrf.mxu0
          %v589 = vadd.f32 %v488, %v588
          %v590 = vpop.f32.mrf.mxu0
          %591 = vmatprep.mubr.f32.mxu0 0.0
          %592 = vmatmul.mubr.f32.gmra.mxu0 %v508
          %v593 = vpop.f32.mrf.mxu0
          %v594 = vadd.f32 %v493, %v593
          %v595 = vpop.f32.mrf.mxu0
          %596 = vmatprep.mubr.f32.mxu0 0.0
          %597 = vmatmul.mubr.f32.gmra.mxu0 %v511
          %v598 = vpop.f32.mrf.mxu0
          %v599 = vadd.f32 %v498, %v598
          %v600 = vpop.f32.mrf.mxu0
          %601 = vdwg.mxu0
          %vm602 = vcmask 523264
          %603 = vst.msk [vmem:[#allocation2] sm:$0xff] %vm602, %v584
          %604 = vst.msk [vmem:[#allocation2 + $0x8] sm:$0xff] %vm602, %v589
          %605 = vst.msk [vmem:[#allocation2 + $0x10] sm:$0xff] %vm602, %v594
          %606 = vst.msk [vmem:[#allocation2 + $0x18] sm:$0xff] %vm602, %v599
        $region76: #{tpu_custom_call.1} parent=71 // pred_fallthru
          _
        // Predicated region
        $region77: #{tpu_custom_call.1} parent=71 // pred_check
          %p607 = pneg %p466
        $region78: #{tpu_custom_call.1} parent=71 // pred_check_branch
          %609 = sbr.rel (%p607) target = $region80
        $region79: #{tpu_custom_call.1} parent=71 // pred_region
          %vm610 = vcmask 523264
          %611 = vst.msk [vmem:[#allocation3] sm:$0xff] %vm610, 0.0
          %612 = vst.msk [vmem:[#allocation3 + $0x8] sm:$0xff] %vm610, 0.0
          %613 = vst.msk [vmem:[#allocation3 + $0x10] sm:$0xff] %vm610, 0.0
          %614 = vst.msk [vmem:[#allocation3 + $0x18] sm:$0xff] %vm610, 0.0
          %v615 = vld [vmem:[#allocation2] sm:$0xff]
          %v616 = vld [vmem:[#allocation2 + $0x8] sm:$0xff]
          %v617 = vld [vmem:[#allocation2 + $0x10] sm:$0xff]
          %v618 = vld [vmem:[#allocation2 + $0x18] sm:$0xff]
          %v619 = vpack.c.bf16 %v616, %v615
          %v620 = vpack.c.bf16 %v618, %v617
          %v623 = vunpack.c.l.b16 %v619
          %v624 = vunpack.c.h.b16 %v619
          %v625 = vunpack.c.l.b16 %v620
          %v626 = vunpack.c.h.b16 %v620
          %v627 = vpack.c.b16 %v623, %v623
          %v628 = vpack.c.b16 %v624, %v624
          %v629 = vpack.c.b16 %v625, %v625
          %v630 = vpack.c.b16 %v626, %v626
          %vm635 = vcmask 519168
          %636 = vst.msk [vmem:[#allocation4] sm:$0xf] %vm635, %v627
          %637 = vst.msk [vmem:[#allocation4 + $0x4] sm:$0xf] %vm635, %v628
          %638 = vst.msk [vmem:[#allocation4 + $0x8] sm:$0xf] %vm635, %v629
          %639 = vst.msk [vmem:[#allocation4 + $0xc] sm:$0xf] %vm635, %v630
        $region80: #{tpu_custom_call.1} parent=71 // pred_fallthru
          _
        %v640 = vld [vmem:[#allocation4] sm:$0xf]
        %v641 = vld [vmem:[#allocation4 + $0x4] sm:$0xf]
        %v642 = vld [vmem:[#allocation4 + $0x8] sm:$0xf]
        %v643 = vld [vmem:[#allocation4 + $0xc] sm:$0xf]
        %v644 = vld [vmem:[%s7] sm:$0xff]
        %v645 = vld [vmem:[%s463] sm:$0x7f]
        %v646 = vld [vmem:[%s8] sm:$0xff]
        %648 = vset.pattern.permute.xlu0 0
        %649 = vperm.xlu0 %648, %v646
        %v650 = vpop.permute.xlu0 %649
        %vm652 = vcmask 56320
        %v654 = vsel %vm652, %v644, 0
        %vm656 = vcmask 1046528
        %v658 = vsel %vm656, %v645, 0
        %660 = vmatprep.subr.mxu0 0.0
        %661 = vmatpush1.msra.mxu0 0.0
        %662 = vmatprep.subr.mxu0 0.0
        %663 = vmatpush1.msra.mxu0 0.0
        %664 = vmatprep.subr.mxu0 0.0
        %665 = vmatpush1.msra.mxu0 0.0
        %666 = vmatprep.subr.mxu0 0.0
        %667 = vmatpush1.msra.mxu0 0.0
        %668 = vmatprep.subr.mxu0 0.0
        %669 = vmatpush1.msra.mxu0 0.0
        %670 = vmatprep.subr.mxu0 0.0
        %671 = vmatpush1.msra.mxu0 0.0
        %672 = vmatprep.subr.mxu0 0.0
        %673 = vmatpush1.msra.mxu0 0.0
        %674 = vmatprep.subr.mxu0 0.0
        %675 = vmatpush1.msra.mxu0 0.0
        %676 = vmatprep.subr.mxu0 0.0
        %677 = vmatpush1.msra.mxu0 0.0
        %678 = vmatprep.subr.mxu0 0.0
        %679 = vmatpush1.msra.mxu0 0.0
        %680 = vmatprep.subr.mxu0 0.0
        %681 = vmatpush1.msra.mxu0 0.0
        %682 = vmatprep.subr.mxu0 0.0
        %683 = vmatpush1.msra.mxu0 0.0
        %684 = vmatprep.subr.mxu0 0.0
        %685 = vmatpush1.msra.mxu0 0.0
        %686 = vmatprep.subr.mxu0 0.0
        %687 = vmatpush1.msra.mxu0 0.0
        %688 = vmatprep.subr.mxu0 0.0
        %689 = vmatpush1.msra.mxu0 0.0
        %690 = vmatprep.subr.mxu0 0.0
        %691 = vmatpush1.msra.mxu0 %v658
        %692 = vmatprep.subr.mxu0 0.0
        %693 = vmatpush2.msra.mxu0 0.0
        %694 = vmatprep.subr.mxu0 0.0
        %695 = vmatpush2.msra.mxu0 0.0
        %696 = vmatprep.subr.mxu0 0.0
        %697 = vmatpush2.msra.mxu0 0.0
        %698 = vmatprep.subr.mxu0 0.0
        %699 = vmatpush2.msra.mxu0 0.0
        %700 = vmatprep.subr.mxu0 0.0
        %701 = vmatpush2.msra.mxu0 0.0
        %702 = vmatprep.subr.mxu0 0.0
        %703 = vmatpush2.msra.mxu0 0.0
        %704 = vmatprep.subr.mxu0 0.0
        %705 = vmatpush2.msra.mxu0 0.0
        %706 = vmatprep.subr.mxu0 0.0
        %707 = vmatpush2.msra.mxu0 0.0
        %708 = vmatprep.subr.mxu0 0.0
        %709 = vmatpush2.msra.mxu0 0.0
        %710 = vmatprep.subr.mxu0 0.0
        %711 = vmatpush2.msra.mxu0 0.0
        %712 = vmatprep.subr.mxu0 0.0
        %713 = vmatpush2.msra.mxu0 0.0
        %714 = vmatprep.subr.mxu0 0.0
        %715 = vmatpush2.msra.mxu0 0.0
        %716 = vmatprep.subr.mxu0 0.0
        %717 = vmatpush2.msra.mxu0 0.0
        %718 = vmatprep.subr.mxu0 0.0
        %719 = vmatpush2.msra.mxu0 0.0
        %720 = vmatprep.subr.mxu0 0.0
        %721 = vmatpush2.msra.mxu0 0.0
        %722 = vmatprep.subr.mxu0 0.0
        %723 = vmatpush2.msra.mxu0 0.0
        %724 = vmatprep.mubr.f32.mxu0 0.0
        %725 = vmatmul.mubr.f32.gmra.mxu0 %v654
        %v726 = vpop.f32.mrf.mxu0
        %v727 = vadd.f32 %v650, %v726
        %v728 = vpop.f32.mrf.mxu0
        %729 = vdwg.mxu0
        %v730 = vmax.f32 %v727, 0.0
        %v731 = vld [vmem:[%s9] sm:$0xff]
        %v732 = vld [vmem:[%s9 + $0x8] sm:$0xff]
        %v733 = vld [vmem:[%s9 + $0x10] sm:$0xff]
        %v734 = vld [vmem:[%s9 + $0x18] sm:$0xff]
        %v735 = vld [vmem:[%s10] sm:$0xff]
        %v736 = vld [vmem:[%s10 + $0x8] sm:$0xff]
        %v737 = vld [vmem:[%s10 + $0x10] sm:$0xff]
        %v738 = vld [vmem:[%s10 + $0x18] sm:$0xff]
        %740 = vset.pattern.permute.xlu0 0
        %741 = vperm.xlu0 %740, %v735
        %v742 = vpop.permute.xlu0 %741
        %745 = vset.pattern.permute.xlu0 0
        %746 = vperm.xlu0 %745, %v736
        %v747 = vpop.permute.xlu0 %746
        %750 = vset.pattern.permute.xlu0 0
        %751 = vperm.xlu0 %750, %v737
        %v752 = vpop.permute.xlu0 %751
        %755 = vset.pattern.permute.xlu0 0
        %756 = vperm.xlu0 %755, %v738
        %v757 = vpop.permute.xlu0 %756
        %vm759 = vcmask 64512
        %v761 = vsel %vm759, %v731, 0
        %v764 = vsel %vm759, %v732, 0
        %v767 = vsel %vm759, %v733, 0
        %v770 = vsel %vm759, %v734, 0
        %772 = vmatprep.subr.mxu0 0.0
        %773 = vmatpush1.msra.mxu0 0.0
        %774 = vmatprep.subr.mxu0 0.0
        %775 = vmatpush1.msra.mxu0 0.0
        %776 = vmatprep.subr.mxu0 0.0
        %777 = vmatpush1.msra.mxu0 0.0
        %778 = vmatprep.subr.mxu0 0.0
        %779 = vmatpush1.msra.mxu0 0.0
        %780 = vmatprep.subr.mxu0 0.0
        %781 = vmatpush1.msra.mxu0 0.0
        %782 = vmatprep.subr.mxu0 0.0
        %783 = vmatpush1.msra.mxu0 0.0
        %784 = vmatprep.subr.mxu0 0.0
        %785 = vmatpush1.msra.mxu0 0.0
        %786 = vmatprep.subr.mxu0 0.0
        %787 = vmatpush1.msra.mxu0 0.0
        %788 = vmatprep.subr.mxu0 0.0
        %789 = vmatpush1.msra.mxu0 0.0
        %790 = vmatprep.subr.mxu0 0.0
        %791 = vmatpush1.msra.mxu0 0.0
        %792 = vmatprep.subr.mxu0 0.0
        %793 = vmatpush1.msra.mxu0 0.0
        %794 = vmatprep.subr.mxu0 0.0
        %795 = vmatpush1.msra.mxu0 0.0
        %796 = vmatprep.subr.mxu0 0.0
        %797 = vmatpush1.msra.mxu0 0.0
        %798 = vmatprep.subr.mxu0 0.0
        %799 = vmatpush1.msra.mxu0 0.0
        %800 = vmatprep.subr.mxu0 0.0
        %801 = vmatpush1.msra.mxu0 0.0
        %802 = vmatprep.subr.mxu0 0.0
        %803 = vmatpush1.msra.mxu0 %v730
        %804 = vmatprep.subr.mxu0 0.0
        %805 = vmatpush2.msra.mxu0 0.0
        %806 = vmatprep.subr.mxu0 0.0
        %807 = vmatpush2.msra.mxu0 0.0
        %808 = vmatprep.subr.mxu0 0.0
        %809 = vmatpush2.msra.mxu0 0.0
        %810 = vmatprep.subr.mxu0 0.0
        %811 = vmatpush2.msra.mxu0 0.0
        %812 = vmatprep.subr.mxu0 0.0
        %813 = vmatpush2.msra.mxu0 0.0
        %814 = vmatprep.subr.mxu0 0.0
        %815 = vmatpush2.msra.mxu0 0.0
        %816 = vmatprep.subr.mxu0 0.0
        %817 = vmatpush2.msra.mxu0 0.0
        %818 = vmatprep.subr.mxu0 0.0
        %819 = vmatpush2.msra.mxu0 0.0
        %820 = vmatprep.subr.mxu0 0.0
        %821 = vmatpush2.msra.mxu0 0.0
        %822 = vmatprep.subr.mxu0 0.0
        %823 = vmatpush2.msra.mxu0 0.0
        %824 = vmatprep.subr.mxu0 0.0
        %825 = vmatpush2.msra.mxu0 0.0
        %826 = vmatprep.subr.mxu0 0.0
        %827 = vmatpush2.msra.mxu0 0.0
        %828 = vmatprep.subr.mxu0 0.0
        %829 = vmatpush2.msra.mxu0 0.0
        %830 = vmatprep.subr.mxu0 0.0
        %831 = vmatpush2.msra.mxu0 0.0
        %832 = vmatprep.subr.mxu0 0.0
        %833 = vmatpush2.msra.mxu0 0.0
        %834 = vmatprep.subr.mxu0 0.0
        %835 = vmatpush2.msra.mxu0 0.0
        %836 = vmatprep.mubr.f32.mxu0 0.0
        %837 = vmatmul.mubr.f32.gmra.mxu0 %v761
        %v838 = vpop.f32.mrf.mxu0
        %v839 = vadd.f32 %v742, %v838
        %v840 = vpop.f32.mrf.mxu0
        %841 = vmatprep.mubr.f32.mxu0 0.0
        %842 = vmatmul.mubr.f32.gmra.mxu0 %v764
        %v843 = vpop.f32.mrf.mxu0
        %v844 = vadd.f32 %v747, %v843
        %v845 = vpop.f32.mrf.mxu0
        %846 = vmatprep.mubr.f32.mxu0 0.0
        %847 = vmatmul.mubr.f32.gmra.mxu0 %v767
        %v848 = vpop.f32.mrf.mxu0
        %v849 = vadd.f32 %v752, %v848
        %v850 = vpop.f32.mrf.mxu0
        %851 = vmatprep.mubr.f32.mxu0 0.0
        %852 = vmatmul.mubr.f32.gmra.mxu0 %v770
        %v853 = vpop.f32.mrf.mxu0
        %v854 = vadd.f32 %v757, %v853
        %v855 = vpop.f32.mrf.mxu0
        %856 = vdwg.mxu0
        %v857 = vlaneseq
        %v858 = vshrl.u32 %v857, 7
        %v859 = vadd.s32 %v858, 8
        %v860 = vadd.s32 %v858, 16
        %v861 = vadd.s32 %v858, 24
        %v862 = vadd.s32 %v858, 32
        %v863 = vadd.s32 %v858, 40
        %v864 = vadd.s32 %v858, 48
        %v865 = vadd.s32 %v858, 56
        %v866 = vld [vmem:[%s456] sm:$0x1]
        %v867 = vlaneseq
        %v868 = vshrl.u32 %v867, 7
        %v869 = vsub.s32 0, %v868
        %v870 = vrot.slane %v866, %v869
        %vm871 = vcmp.eq.s32.totalorder %v858, %v870
        %vm872 = vcmp.eq.s32.totalorder %v859, %v870
        %vm873 = vcmp.eq.s32.totalorder %v860, %v870
        %vm874 = vcmp.eq.s32.totalorder %v861, %v870
        %vm875 = vcmp.eq.s32.totalorder %v862, %v870
        %vm876 = vcmp.eq.s32.totalorder %v863, %v870
        %vm877 = vcmp.eq.s32.totalorder %v864, %v870
        %vm878 = vcmp.eq.s32.totalorder %v865, %v870
        %v879 = vld [vmem:[%s459] sm:$0x1]
        %v880 = vlaneseq
        %v881 = vshrl.u32 %v880, 7
        %v882 = vsub.s32 0, %v881
        %v883 = vrot.slane %v879, %v882
        %vm884 = vcmp.eq.s32.totalorder %v858, %v883
        %vm885 = vcmp.eq.s32.totalorder %v859, %v883
        %vm886 = vcmp.eq.s32.totalorder %v860, %v883
        %vm887 = vcmp.eq.s32.totalorder %v861, %v883
        %vm888 = vcmp.eq.s32.totalorder %v862, %v883
        %vm889 = vcmp.eq.s32.totalorder %v863, %v883
        %vm890 = vcmp.eq.s32.totalorder %v864, %v883
        %vm891 = vcmp.eq.s32.totalorder %v865, %v883
        %v892 = vsel %vm871, 1, 0
        %v893 = vsel %vm872, 1, 0
        %v894 = vsel %vm873, 1, 0
        %v895 = vsel %vm874, 1, 0
        %v896 = vsel %vm875, 1, 0
        %v897 = vsel %vm876, 1, 0
        %v898 = vsel %vm877, 1, 0
        %v899 = vsel %vm878, 1, 0
        %v900 = vcvt.s32.f32 %v892
        %v901 = vcvt.s32.f32 %v893
        %v902 = vcvt.s32.f32 %v894
        %v903 = vcvt.s32.f32 %v895
        %v904 = vcvt.s32.f32 %v896
        %v905 = vcvt.s32.f32 %v897
        %v906 = vcvt.s32.f32 %v898
        %v907 = vcvt.s32.f32 %v899
        %v908 = vpack.c.bf16 %v901, %v900
        %v909 = vpack.c.bf16 %v903, %v902
        %v910 = vpack.c.bf16 %v905, %v904
        %v911 = vpack.c.bf16 %v907, %v906
        %v912 = vsel %vm884, 1, 0
        %v913 = vsel %vm885, 1, 0
        %v914 = vsel %vm886, 1, 0
        %v915 = vsel %vm887, 1, 0
        %v916 = vsel %vm888, 1, 0
        %v917 = vsel %vm889, 1, 0
        %v918 = vsel %vm890, 1, 0
        %v919 = vsel %vm891, 1, 0
        %v920 = vcvt.s32.f32 %v912
        %v921 = vcvt.s32.f32 %v913
        %v922 = vcvt.s32.f32 %v914
        %v923 = vcvt.s32.f32 %v915
        %v924 = vcvt.s32.f32 %v916
        %v925 = vcvt.s32.f32 %v917
        %v926 = vcvt.s32.f32 %v918
        %v927 = vcvt.s32.f32 %v919
        %v928 = vpack.c.bf16 %v921, %v920
        %v929 = vpack.c.bf16 %v923, %v922
        %v930 = vpack.c.bf16 %v925, %v924
        %v931 = vpack.c.bf16 %v927, %v926
        %v936 = vunpack.c.l.b16 %v640
        %v937 = vunpack.c.l.b16 %v641
        %v938 = vunpack.c.l.b16 %v642
        %v939 = vunpack.c.l.b16 %v643
        %v940 = vpack.c.b16 %v937, %v936
        %v941 = vpack.c.b16 %v939, %v938
        %vm942 = vcmask 523264
        %v944 = vsel %vm942, %v940, 0
        %v947 = vsel %vm942, %v941, 0
        %949 = vmatprep.subr.bf16.mxu0 0
        %950 = vmatpush1.bf16.msra.mxu0 0
        %951 = vmatprep.subr.bf16.mxu0 0
        %952 = vmatpush1.bf16.msra.mxu0 0
        %953 = vmatprep.subr.bf16.mxu0 0
        %954 = vmatpush1.bf16.msra.mxu0 0
        %955 = vmatprep.subr.bf16.mxu0 0
        %956 = vmatpush1.bf16.msra.mxu0 0
        %957 = vmatprep.subr.bf16.mxu0 0
        %958 = vmatpush1.bf16.msra.mxu0 %v911
        %959 = vmatprep.subr.bf16.mxu0 0
        %960 = vmatpush1.bf16.msra.mxu0 %v910
        %961 = vmatprep.subr.bf16.mxu0 0
        %962 = vmatpush1.bf16.msra.mxu0 %v909
        %963 = vmatprep.subr.bf16.mxu0 0
        %964 = vmatpush1.bf16.msra.mxu0 %v908
        %965 = vmatprep.subr.bf16.mxu0 0
        %966 = vmatpush2.bf16.msra.mxu0 0
        %967 = vmatprep.subr.bf16.mxu0 0
        %968 = vmatpush2.bf16.msra.mxu0 0
        %969 = vmatprep.subr.bf16.mxu0 0
        %970 = vmatpush2.bf16.msra.mxu0 0
        %971 = vmatprep.subr.bf16.mxu0 0
        %972 = vmatpush2.bf16.msra.mxu0 0
        %973 = vmatprep.subr.bf16.mxu0 0
        %974 = vmatpush2.bf16.msra.mxu0 0
        %975 = vmatprep.subr.bf16.mxu0 0
        %976 = vmatpush2.bf16.msra.mxu0 0
        %977 = vmatprep.subr.bf16.mxu0 0
        %978 = vmatpush2.bf16.msra.mxu0 0
        %979 = vmatprep.subr.bf16.mxu0 0
        %980 = vmatpush2.bf16.msra.mxu0 0
        %981 = vmatprep.mubr.bf16.mxu0 0
        %982 = vmatmul.mubr.bf16.gmra.mxu0 %v944
        %v983 = vpop.f32.mrf.mxu0
        %v984 = vadd.f32 0.0, %v983
        %v985 = vpop.f32.mrf.mxu0
        %v986 = vpop.f32.mrf.mxu0
        %v987 = vadd.f32 0.0, %v986
        %v988 = vpop.f32.mrf.mxu0
        %989 = vmatprep.mubr.bf16.mxu0 0
        %990 = vmatmul.mubr.bf16.gmra.mxu0 %v947
        %v991 = vpop.f32.mrf.mxu0
        %v992 = vadd.f32 0.0, %v991
        %v993 = vpop.f32.mrf.mxu0
        %v994 = vpop.f32.mrf.mxu0
        %v995 = vadd.f32 0.0, %v994
        %v996 = vpop.f32.mrf.mxu0
        %997 = vdwg.mxu0
        %v998 = vmul.f32 %v984, %v839
        %v999 = vmul.f32 %v987, %v844
        %v1000 = vmul.f32 %v992, %v849
        %v1001 = vmul.f32 %v995, %v854
        %v1002 = vld [vmem:[#allocation3] sm:$0xff]
        %v1003 = vld [vmem:[#allocation3 + $0x8] sm:$0xff]
        %v1004 = vld [vmem:[#allocation3 + $0x10] sm:$0xff]
        %v1005 = vld [vmem:[#allocation3 + $0x18] sm:$0xff]
        %v1006 = vpack.c.bf16 %v999, %v998
        %v1007 = vpack.c.bf16 %v1001, %v1000
        %1008 = vmatprep.subr.bf16.mxu0 0
        %1009 = vmatpush1.bf16.xpose.msra.mxu0 0
        %1010 = vmatprep.subr.bf16.mxu0 0
        %1011 = vmatpush1.bf16.xpose.msra.mxu0 0
        %1012 = vmatprep.subr.bf16.mxu0 0
        %1013 = vmatpush1.bf16.xpose.msra.mxu0 0
        %1014 = vmatprep.subr.bf16.mxu0 0
        %1015 = vmatpush1.bf16.xpose.msra.mxu0 0
        %1016 = vmatprep.subr.bf16.mxu0 0
        %1017 = vmatpush1.bf16.xpose.msra.mxu0 %v931
        %1018 = vmatprep.subr.bf16.mxu0 0
        %1019 = vmatpush1.bf16.xpose.msra.mxu0 %v930
        %1020 = vmatprep.subr.bf16.mxu0 0
        %1021 = vmatpush1.bf16.xpose.msra.mxu0 %v929
        %1022 = vmatprep.subr.bf16.mxu0 0
        %1023 = vmatpush1.bf16.xpose.msra.mxu0 %v928
        %1024 = vmatprep.subr.bf16.mxu0 0
        %1025 = vmatpush2.bf16.xpose.msra.mxu0 0
        %1026 = vmatprep.subr.bf16.mxu0 0
        %1027 = vmatpush2.bf16.xpose.msra.mxu0 0
        %1028 = vmatprep.subr.bf16.mxu0 0
        %1029 = vmatpush2.bf16.xpose.msra.mxu0 0
        %1030 = vmatprep.subr.bf16.mxu0 0
        %1031 = vmatpush2.bf16.xpose.msra.mxu0 0
        %1032 = vmatprep.subr.bf16.mxu0 0
        %1033 = vmatpush2.bf16.xpose.msra.mxu0 0
        %1034 = vmatprep.subr.bf16.mxu0 0
        %1035 = vmatpush2.bf16.xpose.msra.mxu0 0
        %1036 = vmatprep.subr.bf16.mxu0 0
        %1037 = vmatpush2.bf16.xpose.msra.mxu0 0
        %1038 = vmatprep.subr.bf16.mxu0 0
        %1039 = vmatpush2.bf16.xpose.msra.mxu0 0
        %1040 = vmatprep.mubr.bf16.mxu0 0
        %1041 = vmatmul.mubr.bf16.gmra.mxu0 %v1006
        %v1042 = vpop.f32.mrf.mxu0
        %v1043 = vadd.f32 0.0, %v1042
        %v1044 = vpop.f32.mrf.mxu0
        %v1045 = vpop.f32.mrf.mxu0
        %v1046 = vadd.f32 0.0, %v1045
        %v1047 = vpop.f32.mrf.mxu0
        %1048 = vmatprep.mubr.bf16.mxu0 0
        %1049 = vmatmul.mubr.bf16.gmra.mxu0 %v1007
        %v1050 = vpop.f32.mrf.mxu0
        %v1051 = vadd.f32 0.0, %v1050
        %v1052 = vpop.f32.mrf.mxu0
        %v1053 = vpop.f32.mrf.mxu0
        %v1054 = vadd.f32 0.0, %v1053
        %v1055 = vpop.f32.mrf.mxu0
        %1056 = vdwg.mxu0
        %v1057 = vadd.f32 %v1002, %v1043
        %v1058 = vadd.f32 %v1003, %v1046
        %v1059 = vadd.f32 %v1004, %v1051
        %v1060 = vadd.f32 %v1005, %v1054
        %1061 = vst.msk [vmem:[#allocation3] sm:$0xff] %vm942, %v1057
        %1062 = vst.msk [vmem:[#allocation3 + $0x8] sm:$0xff] %vm942, %v1058
        %1063 = vst.msk [vmem:[#allocation3 + $0x10] sm:$0xff] %vm942, %v1059
        %1064 = vst.msk [vmem:[#allocation3 + $0x18] sm:$0xff] %vm942, %v1060
        %p1065 = scmp.eq.s32.totalorder %s30, 1
        // Predicated region
        $region81: #{tpu_custom_call.1} parent=71 // pred_check
          %p1066 = pneg %p1065
        $region82: #{tpu_custom_call.1} parent=71 // pred_check_branch
          %1068 = sbr.rel (%p1066) target = $region84
        $region83: #{tpu_custom_call.1} parent=71 // pred_region
          %v1069 = vld [vmem:[#allocation3] sm:$0xff]
          %v1070 = vld [vmem:[#allocation3 + $0x8] sm:$0xff]
          %v1071 = vld [vmem:[#allocation3 + $0x10] sm:$0xff]
          %v1072 = vld [vmem:[#allocation3 + $0x18] sm:$0xff]
          %v1073 = vld [vmem:[%s3] sm:$0x1]
          %v1075 = vlaneseq
          %v1076 = vshrl.u32 %v1075, 7
          %v1077 = vsub.s32 0, %v1076
          %v1078 = vrot.slane %v1073, %v1077
          %v1080 = vmul.f32 %v1069, %v1078
          %v1081 = vmul.f32 %v1070, %v1078
          %v1082 = vmul.f32 %v1071, %v1078
          %v1083 = vmul.f32 %v1072, %v1078
          %v1084 = vld [vmem:[%s11] sm:$0xff]
          %v1085 = vld [vmem:[%s11 + $0x8] sm:$0xff]
          %v1086 = vld [vmem:[%s11 + $0x10] sm:$0xff]
          %v1087 = vld [vmem:[%s11 + $0x18] sm:$0xff]
          %v1088 = vld [vmem:[#allocation2] sm:$0xff]
          %v1089 = vld [vmem:[#allocation2 + $0x8] sm:$0xff]
          %v1090 = vld [vmem:[#allocation2 + $0x10] sm:$0xff]
          %v1091 = vld [vmem:[#allocation2 + $0x18] sm:$0xff]
          %vm1092 = vcmask 261120
          %v1094 = vsel %vm1092, %v1084, 0
          %v1097 = vsel %vm1092, %v1085, 0
          %v1100 = vsel %vm1092, %v1086, 0
          %v1103 = vsel %vm1092, %v1087, 0
          %1105 = vmatprep.subr.mxu0 0.0
          %1106 = vmatpush1.msra.mxu0 0.0
          %1107 = vmatprep.subr.mxu0 0.0
          %1108 = vmatpush1.msra.mxu0 0.0
          %1109 = vmatprep.subr.mxu0 0.0
          %1110 = vmatpush1.msra.mxu0 0.0
          %1111 = vmatprep.subr.mxu0 0.0
          %1112 = vmatpush1.msra.mxu0 0.0
          %1113 = vmatprep.subr.mxu0 0.0
          %1114 = vmatpush1.msra.mxu0 0.0
          %1115 = vmatprep.subr.mxu0 0.0
          %1116 = vmatpush1.msra.mxu0 0.0
          %1117 = vmatprep.subr.mxu0 0.0
          %1118 = vmatpush1.msra.mxu0 0.0
          %1119 = vmatprep.subr.mxu0 0.0
          %1120 = vmatpush1.msra.mxu0 0.0
          %1121 = vmatprep.subr.mxu0 0.0
          %1122 = vmatpush1.msra.mxu0 0.0
          %1123 = vmatprep.subr.mxu0 0.0
          %1124 = vmatpush1.msra.mxu0 0.0
          %1125 = vmatprep.subr.mxu0 0.0
          %1126 = vmatpush1.msra.mxu0 0.0
          %1127 = vmatprep.subr.mxu0 0.0
          %1128 = vmatpush1.msra.mxu0 0.0
          %1129 = vmatprep.subr.mxu0 0.0
          %1130 = vmatpush1.msra.mxu0 %v1091
          %1131 = vmatprep.subr.mxu0 0.0
          %1132 = vmatpush1.msra.mxu0 %v1090
          %1133 = vmatprep.subr.mxu0 0.0
          %1134 = vmatpush1.msra.mxu0 %v1089
          %1135 = vmatprep.subr.mxu0 0.0
          %1136 = vmatpush1.msra.mxu0 %v1088
          %1137 = vmatprep.subr.mxu0 0.0
          %1138 = vmatpush2.msra.mxu0 0.0
          %1139 = vmatprep.subr.mxu0 0.0
          %1140 = vmatpush2.msra.mxu0 0.0
          %1141 = vmatprep.subr.mxu0 0.0
          %1142 = vmatpush2.msra.mxu0 0.0
          %1143 = vmatprep.subr.mxu0 0.0
          %1144 = vmatpush2.msra.mxu0 0.0
          %1145 = vmatprep.subr.mxu0 0.0
          %1146 = vmatpush2.msra.mxu0 0.0
          %1147 = vmatprep.subr.mxu0 0.0
          %1148 = vmatpush2.msra.mxu0 0.0
          %1149 = vmatprep.subr.mxu0 0.0
          %1150 = vmatpush2.msra.mxu0 0.0
          %1151 = vmatprep.subr.mxu0 0.0
          %1152 = vmatpush2.msra.mxu0 0.0
          %1153 = vmatprep.subr.mxu0 0.0
          %1154 = vmatpush2.msra.mxu0 0.0
          %1155 = vmatprep.subr.mxu0 0.0
          %1156 = vmatpush2.msra.mxu0 0.0
          %1157 = vmatprep.subr.mxu0 0.0
          %1158 = vmatpush2.msra.mxu0 0.0
          %1159 = vmatprep.subr.mxu0 0.0
          %1160 = vmatpush2.msra.mxu0 0.0
          %1161 = vmatprep.subr.mxu0 0.0
          %1162 = vmatpush2.msra.mxu0 0.0
          %1163 = vmatprep.subr.mxu0 0.0
          %1164 = vmatpush2.msra.mxu0 0.0
          %1165 = vmatprep.subr.mxu0 0.0
          %1166 = vmatpush2.msra.mxu0 0.0
          %1167 = vmatprep.subr.mxu0 0.0
          %1168 = vmatpush2.msra.mxu0 0.0
          %1169 = vmatprep.mubr.f32.mxu0 0.0
          %1170 = vmatmul.mubr.f32.gmra.mxu0 %v1094
          %v1171 = vpop.f32.mrf.mxu0
          %v1172 = vadd.f32 0.0, %v1171
          %v1173 = vpop.f32.mrf.mxu0
          %1174 = vmatprep.mubr.f32.mxu0 0.0
          %1175 = vmatmul.mubr.f32.gmra.mxu0 %v1097
          %v1176 = vpop.f32.mrf.mxu0
          %v1177 = vadd.f32 0.0, %v1176
          %v1178 = vpop.f32.mrf.mxu0
          %1179 = vmatprep.mubr.f32.mxu0 0.0
          %1180 = vmatmul.mubr.f32.gmra.mxu0 %v1100
          %v1181 = vpop.f32.mrf.mxu0
          %v1182 = vadd.f32 0.0, %v1181
          %v1183 = vpop.f32.mrf.mxu0
          %1184 = vmatprep.mubr.f32.mxu0 0.0
          %1185 = vmatmul.mubr.f32.gmra.mxu0 %v1103
          %v1186 = vpop.f32.mrf.mxu0
          %v1187 = vadd.f32 0.0, %v1186
          %v1188 = vpop.f32.mrf.mxu0
          %1189 = vdwg.mxu0
          %v1190 = vadd.f32 %v1080, %v1172
          %v1191 = vadd.f32 %v1081, %v1177
          %v1192 = vadd.f32 %v1082, %v1182
          %v1193 = vadd.f32 %v1083, %v1187
          %v1194 = vld [vmem:[%s12] sm:$0xff]
          %v1195 = vld [vmem:[%s12 + $0x8] sm:$0xff]
          %v1196 = vld [vmem:[%s12 + $0x10] sm:$0xff]
          %v1197 = vld [vmem:[%s12 + $0x18] sm:$0xff]
          %1199 = vset.pattern.permute.xlu0 0
          %1200 = vperm.xlu0 %1199, %v1194
          %v1201 = vpop.permute.xlu0 %1200
          %1204 = vset.pattern.permute.xlu0 0
          %1205 = vperm.xlu0 %1204, %v1195
          %v1206 = vpop.permute.xlu0 %1205
          %1209 = vset.pattern.permute.xlu0 0
          %1210 = vperm.xlu0 %1209, %v1196
          %v1211 = vpop.permute.xlu0 %1210
          %1214 = vset.pattern.permute.xlu0 0
          %1215 = vperm.xlu0 %1214, %v1197
          %v1216 = vpop.permute.xlu0 %1215
          %v1218 = vadd.f32 %v1190, %v1201
          %v1219 = vadd.f32 %v1191, %v1206
          %v1220 = vadd.f32 %v1192, %v1211
          %v1221 = vadd.f32 %v1193, %v1216
          %v1222 = vmax.f32 %v1218, 0.0
          %v1223 = vmax.f32 %v1219, 0.0
          %v1224 = vmax.f32 %v1220, 0.0
          %v1225 = vmax.f32 %v1221, 0.0
          %1226 = vst.msk [vmem:[#allocation2] sm:$0xff] %vm942, %v1222
          %1227 = vst.msk [vmem:[#allocation2 + $0x8] sm:$0xff] %vm942, %v1223
          %1228 = vst.msk [vmem:[#allocation2 + $0x10] sm:$0xff] %vm942, %v1224
          %1229 = vst.msk [vmem:[#allocation2 + $0x18] sm:$0xff] %vm942, %v1225
        $region84: #{tpu_custom_call.1} parent=71 // pred_fallthru
          _
        %p1230 = scmp.eq.s32.totalorder %s29, 3
        %p1231 = pnand %p1230, %p1065
        %p1232 = pneg %p1231
        // Predicated region
        $region85: #{tpu_custom_call.1} parent=71 // pred_check
          _
        $region86: #{tpu_custom_call.1} parent=71 // pred_check_branch
          %1234 = sbr.rel (%p1231) target = $region88
        $region87: #{tpu_custom_call.1} parent=71 // pred_region
          %v1235 = vld [vmem:[#allocation2] sm:$0xff]
          %v1236 = vld [vmem:[#allocation2 + $0x8] sm:$0xff]
          %v1237 = vld [vmem:[#allocation2 + $0x10] sm:$0xff]
          %v1238 = vld [vmem:[#allocation2 + $0x18] sm:$0xff]
          %1239 = vst.msk [vmem:[#allocation5] sm:$0xff] %vm942, %v1235
          %1240 = vst.msk [vmem:[#allocation5 + $0x8] sm:$0xff] %vm942, %v1236
          %1241 = vst.msk [vmem:[#allocation5 + $0x10] sm:$0xff] %vm942, %v1237
          %1242 = vst.msk [vmem:[#allocation5 + $0x18] sm:$0xff] %vm942, %v1238
        $region88: #{tpu_custom_call.1} parent=71 // pred_fallthru
          _
        // Predicated region
        $region89: #{tpu_custom_call.1} parent=71 // pred_check
          %p1243 = pneg %p338
        $region90: #{tpu_custom_call.1} parent=71 // pred_check_branch
          %1245 = sbr.rel (%p1243) target = $region92
        $region91: #{tpu_custom_call.1} parent=71 // pred_region
          %s1247 = ssub.s32 512, 512
          %1248 = vsyncadd [#allocation6], %s1247
          %s1249 = sshll.u32 [#allocation5], 4
          %s1250 = int_to_ptr.vmem [resolvable:$true] %s1249
          %1255 = dma.vmem_to_hbm [thread:$0]  %s1250, 512, %s13, [#allocation6], 128, 128, 8
        $region92: #{tpu_custom_call.1} parent=71 // pred_fallthru
          _
        // Predicated region
        $region93: #{tpu_custom_call.1} parent=71 // pred_check
          %p1256 = pneg %p338
        $region94: #{tpu_custom_call.1} parent=71 // pred_check_branch
          %1258 = sbr.rel (%p1256) target = $region96
        $region95: #{tpu_custom_call.1} parent=71 // pred_region
          %1259 = dma.done [#allocation6], 512
        $region96: #{tpu_custom_call.1} parent=71 // pred_fallthru
          _
      $region72: #{tpu_custom_call.1} parent=5 // pred_fallthru
        _
      %p1260 = scmp.le.s32.totalorder 2, %s20
      // Predicated region
      $region97: #{tpu_custom_call.1} parent=5 // pred_check
        %p1261 = pneg %p1260
      $region98: #{tpu_custom_call.1} parent=5 // pred_check_branch
        %1263 = sbr.rel (%p1261) target = $region100
      $region99: #{tpu_custom_call.1} parent=5 // pred_region
        %s1264 = ssub.s32 %s20, 2
      $region100: #{tpu_custom_call.1} parent=5 // pred_fallthru
        _
    $region6: #{tpu_custom_call.1} parent=1 // loop_footer
      %s24 = sadd.s32 1, %s20
    $region7: #{tpu_custom_call.1} parent=1 // loop_footer_branch
      %19 = sbr.rel target = $region3
    $region8: #{tpu_custom_call.1} parent=1 // loop_exit
      _
    %1265 = vsyncpa [#allocation6], 1
    %s1266 = scalar_lea.sflag [#allocation6], 1
    %1267 = vsyncpa %s1266, 1

</llo_original>
